<compile_context>
chip_gen: v5e
topology: v5e:2x2
jax: 0.10.0
libtpu: 0.0.40
codegen_flags: <defaults>
</compile_context>

<pallas_src>
import functools

import jax
import jax.numpy as jnp
from jax.experimental import pallas as pl
from jax.experimental.pallas import tpu as pltpu


# ----------------------------------------------------------------------------
# Fused forward kernel.
#
# Inputs (all full-array VMEM refs):
#   x_ref : (T*B, I)  flattened time-major input (row index = t*B + b)
#   per LSTM layer l: wih_t (in_l, 4H), whh_t (H, 4H), bias (1, 4H)
#       (bias = b_ih + b_hh; gate order [i, f, g, o] as in PyTorch)
#   head: ln_g/ln_b (1,H), attn_w1 (H,H), attn_b1 (1,H), attn_w2 (1,H),
#         attn_b2 (1,1), fc1_w (H,H), fc1_b (1,H), ln2_g/ln2_b (1,H),
#         fc2_w (H,O), fc2_b (1,O)
# Output: (B, O)
# Scratch: seq_ref (T*B, H) — current layer's output sequence, VMEM resident.
# ----------------------------------------------------------------------------
def _fused_forward_kernel(x_ref, *refs, num_layers):
    n_lstm = 3 * num_layers
    lstm_refs = [(refs[3 * l], refs[3 * l + 1], refs[3 * l + 2])
                 for l in range(num_layers)]
    (ln_g_ref, ln_b_ref, aw1_ref, ab1_ref, aw2_ref, ab2_ref,
     fc1w_ref, fc1b_ref, ln2g_ref, ln2b_ref,
     fc2w_ref, fc2b_ref) = refs[n_lstm:n_lstm + 12]
    out_ref = refs[n_lstm + 12]
    seq_ref = refs[n_lstm + 13]

    B = out_ref.shape[0]
    TB = x_ref.shape[0]
    T = TB // B
    H = seq_ref.shape[1]

    # -------------------------- LSTM stack ----------------------------------
    for layer in range(num_layers):
        wih_ref, whh_ref, b_ref = lstm_refs[layer]
        cur = x_ref[...] if layer == 0 else seq_ref[...]     # (T*B, in_dim)

        # Hoisted input projection: one MXU matmul over all timesteps.
        gx = (jnp.dot(cur, wih_ref[...],
                      preferred_element_type=jnp.float32)
              + b_ref[...])                                   # (T*B, 4H)

        whh = whh_ref[...]                                    # (H, 4H)

        # Lane mask for gate activations: tanh on the g block, sigmoid else.
        lane = jax.lax.broadcasted_iota(jnp.int32, (B, 4 * H), 1)
        is_g = jnp.logical_and(lane >= 2 * H, lane < 3 * H)

        h = jnp.zeros((B, H), jnp.float32)
        c = jnp.zeros((B, H), jnp.float32)
        for t in range(T):                                    # static unroll
            gates = (gx[t * B:(t + 1) * B, :]
                     + jnp.dot(h, whh,
                               preferred_element_type=jnp.float32))  # (B,4H)
            act = jnp.where(is_g, jnp.tanh(gates), jax.nn.sigmoid(gates))
            i_g = act[:, 0:H]
            f_g = act[:, H:2 * H]
            g_g = act[:, 2 * H:3 * H]
            o_g = act[:, 3 * H:4 * H]
            c = f_g * c + i_g * g_g
            h = o_g * jnp.tanh(c)
            seq_ref[t * B:(t + 1) * B, :] = h                 # VMEM-local store

    # ----------------------------- Head --------------------------------------
    def layer_norm(v, g, b):
        mu = jnp.mean(v, axis=-1, keepdims=True)
        var = jnp.mean(jnp.square(v - mu), axis=-1, keepdims=True)
        return (v - mu) * jax.lax.rsqrt(var + 1e-5) * g + b

    y = seq_ref[...]                                          # (T*B, H)
    yn = layer_norm(y, ln_g_ref[...], ln_b_ref[...])          # (T*B, H)

    a1 = jnp.tanh(jnp.dot(yn, aw1_ref[...],
                          preferred_element_type=jnp.float32)
                  + ab1_ref[...])                             # (T*B, H)
    # Attention score: VPU multiply + lane reduction (avoids N=1 MXU matmul).
    scores = (jnp.sum(a1 * aw2_ref[...], axis=-1, keepdims=True)
              + ab2_ref[...])                                 # (T*B, 1)

    # Softmax over time (rows are ordered t*B + b) and weighted sum.
    srows = [scores[t * B:(t + 1) * B, :] for t in range(T)]  # each (B, 1)
    m = srows[0]
    for t in range(1, T):
        m = jnp.maximum(m, srows[t])
    erows = [jnp.exp(s - m) for s in srows]
    denom = erows[0]
    for t in range(1, T):
        denom = denom + erows[t]
    inv = 1.0 / denom
    context = jnp.zeros((B, H), jnp.float32)
    for t in range(T):
        context = context + (erows[t] * inv) * yn[t * B:(t + 1) * B, :]

    z = (jnp.dot(context, fc1w_ref[...],
                 preferred_element_type=jnp.float32) + fc1b_ref[...])
    z = layer_norm(z, ln2g_ref[...], ln2b_ref[...])
    z = jnp.maximum(z, 0.0)
    # dropout: identity at inference
    z = (jnp.dot(z, fc2w_ref[...],
                 preferred_element_type=jnp.float32) + fc2b_ref[...])
    out_ref[...] = jax.nn.sigmoid(z).astype(out_ref.dtype)


def _fused_forward(x_tm_flat, params, *, seq_len, batch, hidden):
    """x_tm_flat: (T*B, I) flattened time-major. Returns (B, O)."""
    del seq_len  # implied by shapes
    O = params["fc2_w"].shape[1]
    L = len(params["lstm"])

    args = [x_tm_flat]
    for (wih_t, whh_t, bias) in params["lstm"]:
        args += [wih_t, whh_t, bias]
    args += [params["ln_g"], params["ln_b"],
             params["attn_w1"], params["attn_b1"],
             params["attn_w2"], params["attn_b2"],
             params["fc1_w"], params["fc1_b"],
             params["ln2_g"], params["ln2_b"],
             params["fc2_w"], params["fc2_b"]]

    vmem = pl.BlockSpec(memory_space=pltpu.MemorySpace.VMEM)
    kernel = functools.partial(_fused_forward_kernel, num_layers=L)
    return pl.pallas_call(
        kernel,
        out_shape=jax.ShapeDtypeStruct((batch, O), jnp.float32),
        in_specs=[vmem] * len(args),
        out_specs=vmem,
        scratch_shapes=[pltpu.VMEM((x_tm_flat.shape[0], hidden), jnp.float32)],
    )(*args)


# ----------------------------------------------------------------------------
# Parameter construction (deterministic, mirroring the module's _init_weights).
# ----------------------------------------------------------------------------
def _xavier_uniform(key, fan_in, fan_out, shape):
    bound = (6.0 / (fan_in + fan_out)) ** 0.5
    return jax.random.uniform(key, shape, jnp.float32, -bound, bound)


def init_params(key, input_size, hidden_size, num_layers, output_size):
    H = hidden_size
    keys = jax.random.split(key, 4 * num_layers + 8)
    ki = iter(range(len(keys)))

    lstm_layers = []
    for layer in range(num_layers):
        in_sz = input_size if layer == 0 else H
        # weight_ih: xavier_uniform on torch shape (4H, in_sz); stored transposed.
        wih = _xavier_uniform(keys[next(ki)], in_sz, 4 * H, (4 * H, in_sz)).T
        # weight_hh: orthogonal on torch shape (4H, H); stored transposed.
        whh = jax.nn.initializers.orthogonal()(keys[next(ki)], (4 * H, H),
                                               jnp.float32).T
        # bias_ih = 0; bias_hh = 0 except forget gate slice [H:2H] = 1.
        bias = jnp.zeros((4 * H,), jnp.float32).at[H:2 * H].set(1.0)
        lstm_layers.append((jnp.asarray(wih), jnp.asarray(whh),
                            bias.reshape(1, 4 * H)))

    params = {
        "lstm": lstm_layers,
        "ln_g": jnp.ones((1, H), jnp.float32),
        "ln_b": jnp.zeros((1, H), jnp.float32),
        "attn_w1": _xavier_uniform(keys[next(ki)], H, H, (H, H)),
        "attn_b1": jnp.zeros((1, H), jnp.float32),
        # attention.2: Linear(H, 1) — stored as a (1, H) row for VPU reduce.
        "attn_w2": _xavier_uniform(keys[next(ki)], H, 1, (1, H)),
        "attn_b2": jnp.zeros((1, 1), jnp.float32),
        "fc1_w": _xavier_uniform(keys[next(ki)], H, H, (H, H)),
        "fc1_b": jnp.zeros((1, H), jnp.float32),
        "ln2_g": jnp.ones((1, H), jnp.float32),
        "ln2_b": jnp.zeros((1, H), jnp.float32),
        "fc2_w": _xavier_uniform(keys[next(ki)], H, output_size,
                                 (H, output_size)),
        "fc2_b": jnp.zeros((1, output_size), jnp.float32),
    }
    return params


# ----------------------------------------------------------------------------
# Full forward pass (matches LSTM.forward at eval time).
# ----------------------------------------------------------------------------
@jax.jit
def lstm_model_forward(x_bti, params):
    # x: (B, T, I) batch-first, like nn.LSTM(batch_first=True)
    B0, T, I = x_bti.shape
    H = params["lstm"][0][1].shape[0]
    Bp = ((B0 + 7) // 8) * 8                    # pad batch to f32 sublane count
    x = x_bti.astype(jnp.float32)
    if Bp != B0:
        x = jnp.pad(x, ((0, Bp - B0), (0, 0), (0, 0)))
    # One tiny relayout to flattened time-major (row index = t*B + b).
    x_tm = jnp.transpose(x, (1, 0, 2)).reshape(T * Bp, I)
    out = _fused_forward(x_tm, params, seq_len=T, batch=Bp, hidden=H)
    return out[:B0]


# ----------------------------------------------------------------------------
# Pure-JAX reference (for correctness check in __main__).
# ----------------------------------------------------------------------------
def _reference_forward(x, params):
    x = x.astype(jnp.float32)
    B, T, _ = x.shape
    h_seq = x
    for (wih, whh, bias) in params["lstm"]:
        H = whh.shape[0]

        def step(carry, x_t, wih=wih, whh=whh, bias=bias, H=H):
            h, c = carry
            g = x_t @ wih + h @ whh + bias[0]
            i = jax.nn.sigmoid(g[:, :H])
            f = jax.nn.sigmoid(g[:, H:2 * H])
            gg = jnp.tanh(g[:, 2 * H:3 * H])
            o = jax.nn.sigmoid(g[:, 3 * H:])
            c = f * c + i * gg
            h = o * jnp.tanh(c)
            return (h, c), h

        h0 = jnp.zeros((B, H), jnp.float32)
        c0 = jnp.zeros((B, H), jnp.float32)
        _, ys = jax.lax.scan(step, (h0, c0), jnp.swapaxes(h_seq, 0, 1))
        h_seq = jnp.swapaxes(ys, 0, 1)                     # (B, T, H)

    def ln(v, g, b):
        mu = v.mean(-1, keepdims=True)
        var = ((v - mu) ** 2).mean(-1, keepdims=True)
        return (v - mu) * jax.lax.rsqrt(var + 1e-5) * g[0] + b[0]

    y = ln(h_seq, params["ln_g"], params["ln_b"])
    a1 = jnp.tanh(y @ params["attn_w1"] + params["attn_b1"][0])
    sc = jnp.sum(a1 * params["attn_w2"][0], axis=-1, keepdims=True) \
        + params["attn_b2"][0]
    w = jax.nn.softmax(sc, axis=1)
    ctx = jnp.sum(y * w, axis=1)
    z = ctx @ params["fc1_w"] + params["fc1_b"][0]
    z = ln(z, params["ln2_g"], params["ln2_b"])
    z = jax.nn.relu(z)
    z = z @ params["fc2_w"] + params["fc2_b"][0]
    return jax.nn.sigmoid(z)


if __name__ == "__main__":
    B, T, I = 2, 8, 8          # batch, sequence length, input_size
    H, L, O = 32, 2, 1         # hidden_size, num_layers, output_size

    key = jax.random.PRNGKey(0)
    k_x, k_p = jax.random.split(key)
    x = jax.random.normal(k_x, (B, T, I), jnp.float32)
    params = init_params(k_p, I, H, L, O)

    out = lstm_model_forward(x, params)
    out = jax.block_until_ready(out)
    assert out.shape == (B, O)
    assert bool(jnp.all(jnp.isfinite(out)))

    ref = jax.block_until_ready(_reference_forward(x, params))
    assert bool(jnp.allclose(out, ref, atol=1e-3, rtol=1e-3))

    print("KERNEL_OK")
</pallas_src>

<mosaic_0001>
module attributes {stable_mosaic.version = 11 : i64} {
  func.func @_fused_forward_kernel(%arg0: memref<64x8xf32, #tpu.memory_space<vmem>>, %arg1: memref<8x128xf32, #tpu.memory_space<vmem>>, %arg2: memref<32x128xf32, #tpu.memory_space<vmem>>, %arg3: memref<1x128xf32, #tpu.memory_space<vmem>>, %arg4: memref<32x128xf32, #tpu.memory_space<vmem>>, %arg5: memref<32x128xf32, #tpu.memory_space<vmem>>, %arg6: memref<1x128xf32, #tpu.memory_space<vmem>>, %arg7: memref<1x32xf32, #tpu.memory_space<vmem>>, %arg8: memref<1x32xf32, #tpu.memory_space<vmem>>, %arg9: memref<32x32xf32, #tpu.memory_space<vmem>>, %arg10: memref<1x32xf32, #tpu.memory_space<vmem>>, %arg11: memref<1x32xf32, #tpu.memory_space<vmem>>, %arg12: memref<1x1xf32, #tpu.memory_space<vmem>>, %arg13: memref<32x32xf32, #tpu.memory_space<vmem>>, %arg14: memref<1x32xf32, #tpu.memory_space<vmem>>, %arg15: memref<1x32xf32, #tpu.memory_space<vmem>>, %arg16: memref<1x32xf32, #tpu.memory_space<vmem>>, %arg17: memref<32x1xf32, #tpu.memory_space<vmem>>, %arg18: memref<1x1xf32, #tpu.memory_space<vmem>>, %arg19: memref<8x1xf32, #tpu.memory_space<vmem>>, %arg20: memref<64x32xf32, #tpu.memory_space<vmem>>) attributes {dimension_semantics = [], scalar_prefetch = 0 : i64, scratch_operands = 1 : i64, tpu.core_type = #tpu.core_type<tc>} {
    %c0 = arith.constant 0 : index
    %c0_0 = arith.constant 0 : index
    %0 = vector.load %arg0[%c0, %c0_0] : memref<64x8xf32, #tpu.memory_space<vmem>>, vector<64x8xf32>
    %c0_1 = arith.constant 0 : index
    %c0_2 = arith.constant 0 : index
    %1 = vector.load %arg1[%c0_1, %c0_2] : memref<8x128xf32, #tpu.memory_space<vmem>>, vector<8x128xf32>
    %cst = arith.constant dense<0.000000e+00> : vector<64x128xf32>
    %2 = tpu.matmul %0, %1, %cst {dimension_numbers = #tpu.dot_dimension_numbers<[1], [0], [0], [1], [0, 0, 1, 1], [], []>} : vector<64x8xf32>, vector<8x128xf32>, vector<64x128xf32> -> vector<64x128xf32>
    %c0_3 = arith.constant 0 : index
    %c0_4 = arith.constant 0 : index
    %3 = vector.load %arg3[%c0_3, %c0_4] : memref<1x128xf32, #tpu.memory_space<vmem>>, vector<1x128xf32>
    %4 = vector.broadcast %3 : vector<1x128xf32> to vector<64x128xf32>
    %5 = arith.addf %2, %4 : vector<64x128xf32>
    %c0_5 = arith.constant 0 : index
    %c0_6 = arith.constant 0 : index
    %6 = vector.load %arg2[%c0_5, %c0_6] : memref<32x128xf32, #tpu.memory_space<vmem>>, vector<32x128xf32>
    %7 = tpu.iota {dimensions = array<i32: 1>} : vector<8x128xi32>
    %c64_i32 = arith.constant 64 : i32
    %8 = vector.broadcast %c64_i32 : i32 to vector<8x128xi32>
    %9 = arith.cmpi sge, %7, %8 : vector<8x128xi32>
    %c96_i32 = arith.constant 96 : i32
    %10 = vector.broadcast %c96_i32 : i32 to vector<8x128xi32>
    %11 = arith.cmpi slt, %7, %10 : vector<8x128xi32>
    %12 = arith.andi %9, %11 : vector<8x128xi1>
    %cst_7 = arith.constant 0.000000e+00 : f32
    %13 = vector.broadcast %cst_7 : f32 to vector<8x32xf32>
    %cst_8 = arith.constant 0.000000e+00 : f32
    %14 = vector.broadcast %cst_8 : f32 to vector<8x32xf32>
    %15 = vector.extract_strided_slice %5 {offsets = [0, 0], sizes = [8, 128], strides = [1, 1]} : vector<64x128xf32> to vector<8x128xf32>
    %cst_9 = arith.constant dense<0.000000e+00> : vector<8x128xf32>
    %16 = tpu.matmul %13, %6, %cst_9 {dimension_numbers = #tpu.dot_dimension_numbers<[1], [0], [0], [1], [0, 0, 1, 1], [], []>} : vector<8x32xf32>, vector<32x128xf32>, vector<8x128xf32> -> vector<8x128xf32>
    %17 = arith.addf %15, %16 : vector<8x128xf32>
    %18 = math.tanh %17 : vector<8x128xf32>
    %19 = arith.negf %17 : vector<8x128xf32>
    %20 = math.exp %19 : vector<8x128xf32>
    %cst_10 = arith.constant 1.000000e+00 : f32
    %21 = vector.broadcast %cst_10 : f32 to vector<8x128xf32>
    %22 = arith.addf %21, %20 : vector<8x128xf32>
    %23 = arith.divf %21, %22 : vector<8x128xf32>
    %24 = arith.select %12, %18, %23 : vector<8x128xi1>, vector<8x128xf32>
    %25 = vector.extract_strided_slice %24 {offsets = [0, 0], sizes = [8, 32], strides = [1, 1]} : vector<8x128xf32> to vector<8x32xf32>
    %26 = vector.extract_strided_slice %24 {offsets = [0, 32], sizes = [8, 32], strides = [1, 1]} : vector<8x128xf32> to vector<8x32xf32>
    %27 = vector.extract_strided_slice %24 {offsets = [0, 64], sizes = [8, 32], strides = [1, 1]} : vector<8x128xf32> to vector<8x32xf32>
    %28 = vector.extract_strided_slice %24 {offsets = [0, 96], sizes = [8, 32], strides = [1, 1]} : vector<8x128xf32> to vector<8x32xf32>
    %29 = arith.mulf %26, %14 : vector<8x32xf32>
    %30 = arith.mulf %25, %27 : vector<8x32xf32>
    %31 = arith.addf %29, %30 : vector<8x32xf32>
    %32 = math.tanh %31 : vector<8x32xf32>
    %33 = arith.mulf %28, %32 : vector<8x32xf32>
    %c0_11 = arith.constant 0 : index
    %c0_12 = arith.constant 0 : index
    %34 = vector.load %arg20[%c0_11, %c0_12] : memref<64x32xf32, #tpu.memory_space<vmem>>, vector<8x32xf32>
    tpu.vector_store %arg20[%c0_11, %c0_12], %33 {strides = array<i32>} : memref<64x32xf32, #tpu.memory_space<vmem>>, vector<8x32xf32>,
    %35 = vector.extract_strided_slice %5 {offsets = [8, 0], sizes = [8, 128], strides = [1, 1]} : vector<64x128xf32> to vector<8x128xf32>
    %cst_13 = arith.constant dense<0.000000e+00> : vector<8x128xf32>
    %36 = tpu.matmul %33, %6, %cst_13 {dimension_numbers = #tpu.dot_dimension_numbers<[1], [0], [0], [1], [0, 0, 1, 1], [], []>} : vector<8x32xf32>, vector<32x128xf32>, vector<8x128xf32> -> vector<8x128xf32>
    %37 = arith.addf %35, %36 : vector<8x128xf32>
    %38 = math.tanh %37 : vector<8x128xf32>
    %39 = arith.negf %37 : vector<8x128xf32>
    %40 = math.exp %39 : vector<8x128xf32>
    %cst_14 = arith.constant 1.000000e+00 : f32
    %41 = vector.broadcast %cst_14 : f32 to vector<8x128xf32>
    %42 = arith.addf %41, %40 : vector<8x128xf32>
    %43 = arith.divf %41, %42 : vector<8x128xf32>
    %44 = arith.select %12, %38, %43 : vector<8x128xi1>, vector<8x128xf32>
    %45 = vector.extract_strided_slice %44 {offsets = [0, 0], sizes = [8, 32], strides = [1, 1]} : vector<8x128xf32> to vector<8x32xf32>
    %46 = vector.extract_strided_slice %44 {offsets = [0, 32], sizes = [8, 32], strides = [1, 1]} : vector<8x128xf32> to vector<8x32xf32>
    %47 = vector.extract_strided_slice %44 {offsets = [0, 64], sizes = [8, 32], strides = [1, 1]} : vector<8x128xf32> to vector<8x32xf32>
    %48 = vector.extract_strided_slice %44 {offsets = [0, 96], sizes = [8, 32], strides = [1, 1]} : vector<8x128xf32> to vector<8x32xf32>
    %49 = arith.mulf %46, %31 : vector<8x32xf32>
    %50 = arith.mulf %45, %47 : vector<8x32xf32>
    %51 = arith.addf %49, %50 : vector<8x32xf32>
    %52 = math.tanh %51 : vector<8x32xf32>
    %53 = arith.mulf %48, %52 : vector<8x32xf32>
    %c8 = arith.constant 8 : index
    %c0_15 = arith.constant 0 : index
    %54 = vector.load %arg20[%c8, %c0_15] : memref<64x32xf32, #tpu.memory_space<vmem>>, vector<8x32xf32>
    tpu.vector_store %arg20[%c8, %c0_15], %53 {strides = array<i32>} : memref<64x32xf32, #tpu.memory_space<vmem>>, vector<8x32xf32>,
    %55 = vector.extract_strided_slice %5 {offsets = [16, 0], sizes = [8, 128], strides = [1, 1]} : vector<64x128xf32> to vector<8x128xf32>
    %cst_16 = arith.constant dense<0.000000e+00> : vector<8x128xf32>
    %56 = tpu.matmul %53, %6, %cst_16 {dimension_numbers = #tpu.dot_dimension_numbers<[1], [0], [0], [1], [0, 0, 1, 1], [], []>} : vector<8x32xf32>, vector<32x128xf32>, vector<8x128xf32> -> vector<8x128xf32>
    %57 = arith.addf %55, %56 : vector<8x128xf32>
    %58 = math.tanh %57 : vector<8x128xf32>
    %59 = arith.negf %57 : vector<8x128xf32>
    %60 = math.exp %59 : vector<8x128xf32>
    %cst_17 = arith.constant 1.000000e+00 : f32
    %61 = vector.broadcast %cst_17 : f32 to vector<8x128xf32>
    %62 = arith.addf %61, %60 : vector<8x128xf32>
    %63 = arith.divf %61, %62 : vector<8x128xf32>
    %64 = arith.select %12, %58, %63 : vector<8x128xi1>, vector<8x128xf32>
    %65 = vector.extract_strided_slice %64 {offsets = [0, 0], sizes = [8, 32], strides = [1, 1]} : vector<8x128xf32> to vector<8x32xf32>
    %66 = vector.extract_strided_slice %64 {offsets = [0, 32], sizes = [8, 32], strides = [1, 1]} : vector<8x128xf32> to vector<8x32xf32>
    %67 = vector.extract_strided_slice %64 {offsets = [0, 64], sizes = [8, 32], strides = [1, 1]} : vector<8x128xf32> to vector<8x32xf32>
    %68 = vector.extract_strided_slice %64 {offsets = [0, 96], sizes = [8, 32], strides = [1, 1]} : vector<8x128xf32> to vector<8x32xf32>
    %69 = arith.mulf %66, %51 : vector<8x32xf32>
    %70 = arith.mulf %65, %67 : vector<8x32xf32>
    %71 = arith.addf %69, %70 : vector<8x32xf32>
    %72 = math.tanh %71 : vector<8x32xf32>
    %73 = arith.mulf %68, %72 : vector<8x32xf32>
    %c16 = arith.constant 16 : index
    %c0_18 = arith.constant 0 : index
    %74 = vector.load %arg20[%c16, %c0_18] : memref<64x32xf32, #tpu.memory_space<vmem>>, vector<8x32xf32>
    tpu.vector_store %arg20[%c16, %c0_18], %73 {strides = array<i32>} : memref<64x32xf32, #tpu.memory_space<vmem>>, vector<8x32xf32>,
    %75 = vector.extract_strided_slice %5 {offsets = [24, 0], sizes = [8, 128], strides = [1, 1]} : vector<64x128xf32> to vector<8x128xf32>
    %cst_19 = arith.constant dense<0.000000e+00> : vector<8x128xf32>
    %76 = tpu.matmul %73, %6, %cst_19 {dimension_numbers = #tpu.dot_dimension_numbers<[1], [0], [0], [1], [0, 0, 1, 1], [], []>} : vector<8x32xf32>, vector<32x128xf32>, vector<8x128xf32> -> vector<8x128xf32>
    %77 = arith.addf %75, %76 : vector<8x128xf32>
    %78 = math.tanh %77 : vector<8x128xf32>
    %79 = arith.negf %77 : vector<8x128xf32>
    %80 = math.exp %79 : vector<8x128xf32>
    %cst_20 = arith.constant 1.000000e+00 : f32
    %81 = vector.broadcast %cst_20 : f32 to vector<8x128xf32>
    %82 = arith.addf %81, %80 : vector<8x128xf32>
    %83 = arith.divf %81, %82 : vector<8x128xf32>
    %84 = arith.select %12, %78, %83 : vector<8x128xi1>, vector<8x128xf32>
    %85 = vector.extract_strided_slice %84 {offsets = [0, 0], sizes = [8, 32], strides = [1, 1]} : vector<8x128xf32> to vector<8x32xf32>
    %86 = vector.extract_strided_slice %84 {offsets = [0, 32], sizes = [8, 32], strides = [1, 1]} : vector<8x128xf32> to vector<8x32xf32>
    %87 = vector.extract_strided_slice %84 {offsets = [0, 64], sizes = [8, 32], strides = [1, 1]} : vector<8x128xf32> to vector<8x32xf32>
    %88 = vector.extract_strided_slice %84 {offsets = [0, 96], sizes = [8, 32], strides = [1, 1]} : vector<8x128xf32> to vector<8x32xf32>
    %89 = arith.mulf %86, %71 : vector<8x32xf32>
    %90 = arith.mulf %85, %87 : vector<8x32xf32>
    %91 = arith.addf %89, %90 : vector<8x32xf32>
    %92 = math.tanh %91 : vector<8x32xf32>
    %93 = arith.mulf %88, %92 : vector<8x32xf32>
    %c24 = arith.constant 24 : index
    %c0_21 = arith.constant 0 : index
    %94 = vector.load %arg20[%c24, %c0_21] : memref<64x32xf32, #tpu.memory_space<vmem>>, vector<8x32xf32>
    tpu.vector_store %arg20[%c24, %c0_21], %93 {strides = array<i32>} : memref<64x32xf32, #tpu.memory_space<vmem>>, vector<8x32xf32>,
    %95 = vector.extract_strided_slice %5 {offsets = [32, 0], sizes = [8, 128], strides = [1, 1]} : vector<64x128xf32> to vector<8x128xf32>
    %cst_22 = arith.constant dense<0.000000e+00> : vector<8x128xf32>
    %96 = tpu.matmul %93, %6, %cst_22 {dimension_numbers = #tpu.dot_dimension_numbers<[1], [0], [0], [1], [0, 0, 1, 1], [], []>} : vector<8x32xf32>, vector<32x128xf32>, vector<8x128xf32> -> vector<8x128xf32>
    %97 = arith.addf %95, %96 : vector<8x128xf32>
    %98 = math.tanh %97 : vector<8x128xf32>
    %99 = arith.negf %97 : vector<8x128xf32>
    %100 = math.exp %99 : vector<8x128xf32>
    %cst_23 = arith.constant 1.000000e+00 : f32
    %101 = vector.broadcast %cst_23 : f32 to vector<8x128xf32>
    %102 = arith.addf %101, %100 : vector<8x128xf32>
    %103 = arith.divf %101, %102 : vector<8x128xf32>
    %104 = arith.select %12, %98, %103 : vector<8x128xi1>, vector<8x128xf32>
    %105 = vector.extract_strided_slice %104 {offsets = [0, 0], sizes = [8, 32], strides = [1, 1]} : vector<8x128xf32> to vector<8x32xf32>
    %106 = vector.extract_strided_slice %104 {offsets = [0, 32], sizes = [8, 32], strides = [1, 1]} : vector<8x128xf32> to vector<8x32xf32>
    %107 = vector.extract_strided_slice %104 {offsets = [0, 64], sizes = [8, 32], strides = [1, 1]} : vector<8x128xf32> to vector<8x32xf32>
    %108 = vector.extract_strided_slice %104 {offsets = [0, 96], sizes = [8, 32], strides = [1, 1]} : vector<8x128xf32> to vector<8x32xf32>
    %109 = arith.mulf %106, %91 : vector<8x32xf32>
    %110 = arith.mulf %105, %107 : vector<8x32xf32>
    %111 = arith.addf %109, %110 : vector<8x32xf32>
    %112 = math.tanh %111 : vector<8x32xf32>
    %113 = arith.mulf %108, %112 : vector<8x32xf32>
    %c32 = arith.constant 32 : index
    %c0_24 = arith.constant 0 : index
    %114 = vector.load %arg20[%c32, %c0_24] : memref<64x32xf32, #tpu.memory_space<vmem>>, vector<8x32xf32>
    tpu.vector_store %arg20[%c32, %c0_24], %113 {strides = array<i32>} : memref<64x32xf32, #tpu.memory_space<vmem>>, vector<8x32xf32>,
    %115 = vector.extract_strided_slice %5 {offsets = [40, 0], sizes = [8, 128], strides = [1, 1]} : vector<64x128xf32> to vector<8x128xf32>
    %cst_25 = arith.constant dense<0.000000e+00> : vector<8x128xf32>
    %116 = tpu.matmul %113, %6, %cst_25 {dimension_numbers = #tpu.dot_dimension_numbers<[1], [0], [0], [1], [0, 0, 1, 1], [], []>} : vector<8x32xf32>, vector<32x128xf32>, vector<8x128xf32> -> vector<8x128xf32>
    %117 = arith.addf %115, %116 : vector<8x128xf32>
    %118 = math.tanh %117 : vector<8x128xf32>
    %119 = arith.negf %117 : vector<8x128xf32>
    %120 = math.exp %119 : vector<8x128xf32>
    %cst_26 = arith.constant 1.000000e+00 : f32
    %121 = vector.broadcast %cst_26 : f32 to vector<8x128xf32>
    %122 = arith.addf %121, %120 : vector<8x128xf32>
    %123 = arith.divf %121, %122 : vector<8x128xf32>
    %124 = arith.select %12, %118, %123 : vector<8x128xi1>, vector<8x128xf32>
    %125 = vector.extract_strided_slice %124 {offsets = [0, 0], sizes = [8, 32], strides = [1, 1]} : vector<8x128xf32> to vector<8x32xf32>
    %126 = vector.extract_strided_slice %124 {offsets = [0, 32], sizes = [8, 32], strides = [1, 1]} : vector<8x128xf32> to vector<8x32xf32>
    %127 = vector.extract_strided_slice %124 {offsets = [0, 64], sizes = [8, 32], strides = [1, 1]} : vector<8x128xf32> to vector<8x32xf32>
    %128 = vector.extract_strided_slice %124 {offsets = [0, 96], sizes = [8, 32], strides = [1, 1]} : vector<8x128xf32> to vector<8x32xf32>
    %129 = arith.mulf %126, %111 : vector<8x32xf32>
    %130 = arith.mulf %125, %127 : vector<8x32xf32>
    %131 = arith.addf %129, %130 : vector<8x32xf32>
    %132 = math.tanh %131 : vector<8x32xf32>
    %133 = arith.mulf %128, %132 : vector<8x32xf32>
    %c40 = arith.constant 40 : index
    %c0_27 = arith.constant 0 : index
    %134 = vector.load %arg20[%c40, %c0_27] : memref<64x32xf32, #tpu.memory_space<vmem>>, vector<8x32xf32>
    tpu.vector_store %arg20[%c40, %c0_27], %133 {strides = array<i32>} : memref<64x32xf32, #tpu.memory_space<vmem>>, vector<8x32xf32>,
    %135 = vector.extract_strided_slice %5 {offsets = [48, 0], sizes = [8, 128], strides = [1, 1]} : vector<64x128xf32> to vector<8x128xf32>
    %cst_28 = arith.constant dense<0.000000e+00> : vector<8x128xf32>
    %136 = tpu.matmul %133, %6, %cst_28 {dimension_numbers = #tpu.dot_dimension_numbers<[1], [0], [0], [1], [0, 0, 1, 1], [], []>} : vector<8x32xf32>, vector<32x128xf32>, vector<8x128xf32> -> vector<8x128xf32>
    %137 = arith.addf %135, %136 : vector<8x128xf32>
    %138 = math.tanh %137 : vector<8x128xf32>
    %139 = arith.negf %137 : vector<8x128xf32>
    %140 = math.exp %139 : vector<8x128xf32>
    %cst_29 = arith.constant 1.000000e+00 : f32
    %141 = vector.broadcast %cst_29 : f32 to vector<8x128xf32>
    %142 = arith.addf %141, %140 : vector<8x128xf32>
    %143 = arith.divf %141, %142 : vector<8x128xf32>
    %144 = arith.select %12, %138, %143 : vector<8x128xi1>, vector<8x128xf32>
    %145 = vector.extract_strided_slice %144 {offsets = [0, 0], sizes = [8, 32], strides = [1, 1]} : vector<8x128xf32> to vector<8x32xf32>
    %146 = vector.extract_strided_slice %144 {offsets = [0, 32], sizes = [8, 32], strides = [1, 1]} : vector<8x128xf32> to vector<8x32xf32>
    %147 = vector.extract_strided_slice %144 {offsets = [0, 64], sizes = [8, 32], strides = [1, 1]} : vector<8x128xf32> to vector<8x32xf32>
    %148 = vector.extract_strided_slice %144 {offsets = [0, 96], sizes = [8, 32], strides = [1, 1]} : vector<8x128xf32> to vector<8x32xf32>
    %149 = arith.mulf %146, %131 : vector<8x32xf32>
    %150 = arith.mulf %145, %147 : vector<8x32xf32>
    %151 = arith.addf %149, %150 : vector<8x32xf32>
    %152 = math.tanh %151 : vector<8x32xf32>
    %153 = arith.mulf %148, %152 : vector<8x32xf32>
    %c48 = arith.constant 48 : index
    %c0_30 = arith.constant 0 : index
    %154 = vector.load %arg20[%c48, %c0_30] : memref<64x32xf32, #tpu.memory_space<vmem>>, vector<8x32xf32>
    tpu.vector_store %arg20[%c48, %c0_30], %153 {strides = array<i32>} : memref<64x32xf32, #tpu.memory_space<vmem>>, vector<8x32xf32>,
    %155 = vector.extract_strided_slice %5 {offsets = [56, 0], sizes = [8, 128], strides = [1, 1]} : vector<64x128xf32> to vector<8x128xf32>
    %cst_31 = arith.constant dense<0.000000e+00> : vector<8x128xf32>
    %156 = tpu.matmul %153, %6, %cst_31 {dimension_numbers = #tpu.dot_dimension_numbers<[1], [0], [0], [1], [0, 0, 1, 1], [], []>} : vector<8x32xf32>, vector<32x128xf32>, vector<8x128xf32> -> vector<8x128xf32>
    %157 = arith.addf %155, %156 : vector<8x128xf32>
    %158 = math.tanh %157 : vector<8x128xf32>
    %159 = arith.negf %157 : vector<8x128xf32>
    %160 = math.exp %159 : vector<8x128xf32>
    %cst_32 = arith.constant 1.000000e+00 : f32
    %161 = vector.broadcast %cst_32 : f32 to vector<8x128xf32>
    %162 = arith.addf %161, %160 : vector<8x128xf32>
    %163 = arith.divf %161, %162 : vector<8x128xf32>
    %164 = arith.select %12, %158, %163 : vector<8x128xi1>, vector<8x128xf32>
    %165 = vector.extract_strided_slice %164 {offsets = [0, 0], sizes = [8, 32], strides = [1, 1]} : vector<8x128xf32> to vector<8x32xf32>
    %166 = vector.extract_strided_slice %164 {offsets = [0, 32], sizes = [8, 32], strides = [1, 1]} : vector<8x128xf32> to vector<8x32xf32>
    %167 = vector.extract_strided_slice %164 {offsets = [0, 64], sizes = [8, 32], strides = [1, 1]} : vector<8x128xf32> to vector<8x32xf32>
    %168 = vector.extract_strided_slice %164 {offsets = [0, 96], sizes = [8, 32], strides = [1, 1]} : vector<8x128xf32> to vector<8x32xf32>
    %169 = arith.mulf %166, %151 : vector<8x32xf32>
    %170 = arith.mulf %165, %167 : vector<8x32xf32>
    %171 = arith.addf %169, %170 : vector<8x32xf32>
    %172 = math.tanh %171 : vector<8x32xf32>
    %173 = arith.mulf %168, %172 : vector<8x32xf32>
    %c56 = arith.constant 56 : index
    %c0_33 = arith.constant 0 : index
    %174 = vector.load %arg20[%c56, %c0_33] : memref<64x32xf32, #tpu.memory_space<vmem>>, vector<8x32xf32>
    tpu.vector_store %arg20[%c56, %c0_33], %173 {strides = array<i32>} : memref<64x32xf32, #tpu.memory_space<vmem>>, vector<8x32xf32>,
    %c0_34 = arith.constant 0 : index
    %c0_35 = arith.constant 0 : index
    %175 = vector.load %arg20[%c0_34, %c0_35] : memref<64x32xf32, #tpu.memory_space<vmem>>, vector<64x32xf32>
    %c0_36 = arith.constant 0 : index
    %c0_37 = arith.constant 0 : index
    %176 = vector.load %arg4[%c0_36, %c0_37] : memref<32x128xf32, #tpu.memory_space<vmem>>, vector<32x128xf32>
    %cst_38 = arith.constant dense<0.000000e+00> : vector<64x128xf32>
    %177 = tpu.matmul %175, %176, %cst_38 {dimension_numbers = #tpu.dot_dimension_numbers<[1], [0], [0], [1], [0, 0, 1, 1], [], []>} : vector<64x32xf32>, vector<32x128xf32>, vector<64x128xf32> -> vector<64x128xf32>
    %c0_39 = arith.constant 0 : index
    %c0_40 = arith.constant 0 : index
    %178 = vector.load %arg6[%c0_39, %c0_40] : memref<1x128xf32, #tpu.memory_space<vmem>>, vector<1x128xf32>
    %179 = vector.broadcast %178 : vector<1x128xf32> to vector<64x128xf32>
    %180 = arith.addf %177, %179 : vector<64x128xf32>
    %c0_41 = arith.constant 0 : index
    %c0_42 = arith.constant 0 : index
    %181 = vector.load %arg5[%c0_41, %c0_42] : memref<32x128xf32, #tpu.memory_space<vmem>>, vector<32x128xf32>
    %182 = tpu.iota {dimensions = array<i32: 1>} : vector<8x128xi32>
    %c64_i32_43 = arith.constant 64 : i32
    %183 = vector.broadcast %c64_i32_43 : i32 to vector<8x128xi32>
    %184 = arith.cmpi sge, %182, %183 : vector<8x128xi32>
    %c96_i32_44 = arith.constant 96 : i32
    %185 = vector.broadcast %c96_i32_44 : i32 to vector<8x128xi32>
    %186 = arith.cmpi slt, %182, %185 : vector<8x128xi32>
    %187 = arith.andi %184, %186 : vector<8x128xi1>
    %cst_45 = arith.constant 0.000000e+00 : f32
    %188 = vector.broadcast %cst_45 : f32 to vector<8x32xf32>
    %cst_46 = arith.constant 0.000000e+00 : f32
    %189 = vector.broadcast %cst_46 : f32 to vector<8x32xf32>
    %190 = vector.extract_strided_slice %180 {offsets = [0, 0], sizes = [8, 128], strides = [1, 1]} : vector<64x128xf32> to vector<8x128xf32>
    %cst_47 = arith.constant dense<0.000000e+00> : vector<8x128xf32>
    %191 = tpu.matmul %188, %181, %cst_47 {dimension_numbers = #tpu.dot_dimension_numbers<[1], [0], [0], [1], [0, 0, 1, 1], [], []>} : vector<8x32xf32>, vector<32x128xf32>, vector<8x128xf32> -> vector<8x128xf32>
    %192 = arith.addf %190, %191 : vector<8x128xf32>
    %193 = math.tanh %192 : vector<8x128xf32>
    %194 = arith.negf %192 : vector<8x128xf32>
    %195 = math.exp %194 : vector<8x128xf32>
    %cst_48 = arith.constant 1.000000e+00 : f32
    %196 = vector.broadcast %cst_48 : f32 to vector<8x128xf32>
    %197 = arith.addf %196, %195 : vector<8x128xf32>
    %198 = arith.divf %196, %197 : vector<8x128xf32>
    %199 = arith.select %187, %193, %198 : vector<8x128xi1>, vector<8x128xf32>
    %200 = vector.extract_strided_slice %199 {offsets = [0, 0], sizes = [8, 32], strides = [1, 1]} : vector<8x128xf32> to vector<8x32xf32>
    %201 = vector.extract_strided_slice %199 {offsets = [0, 32], sizes = [8, 32], strides = [1, 1]} : vector<8x128xf32> to vector<8x32xf32>
    %202 = vector.extract_strided_slice %199 {offsets = [0, 64], sizes = [8, 32], strides = [1, 1]} : vector<8x128xf32> to vector<8x32xf32>
    %203 = vector.extract_strided_slice %199 {offsets = [0, 96], sizes = [8, 32], strides = [1, 1]} : vector<8x128xf32> to vector<8x32xf32>
    %204 = arith.mulf %201, %189 : vector<8x32xf32>
    %205 = arith.mulf %200, %202 : vector<8x32xf32>
    %206 = arith.addf %204, %205 : vector<8x32xf32>
    %207 = math.tanh %206 : vector<8x32xf32>
    %208 = arith.mulf %203, %207 : vector<8x32xf32>
    %c0_49 = arith.constant 0 : index
    %c0_50 = arith.constant 0 : index
    %209 = vector.load %arg20[%c0_49, %c0_50] : memref<64x32xf32, #tpu.memory_space<vmem>>, vector<8x32xf32>
    tpu.vector_store %arg20[%c0_49, %c0_50], %208 {strides = array<i32>} : memref<64x32xf32, #tpu.memory_space<vmem>>, vector<8x32xf32>,
    %210 = vector.extract_strided_slice %180 {offsets = [8, 0], sizes = [8, 128], strides = [1, 1]} : vector<64x128xf32> to vector<8x128xf32>
    %cst_51 = arith.constant dense<0.000000e+00> : vector<8x128xf32>
    %211 = tpu.matmul %208, %181, %cst_51 {dimension_numbers = #tpu.dot_dimension_numbers<[1], [0], [0], [1], [0, 0, 1, 1], [], []>} : vector<8x32xf32>, vector<32x128xf32>, vector<8x128xf32> -> vector<8x128xf32>
    %212 = arith.addf %210, %211 : vector<8x128xf32>
    %213 = math.tanh %212 : vector<8x128xf32>
    %214 = arith.negf %212 : vector<8x128xf32>
    %215 = math.exp %214 : vector<8x128xf32>
    %cst_52 = arith.constant 1.000000e+00 : f32
    %216 = vector.broadcast %cst_52 : f32 to vector<8x128xf32>
    %217 = arith.addf %216, %215 : vector<8x128xf32>
    %218 = arith.divf %216, %217 : vector<8x128xf32>
    %219 = arith.select %187, %213, %218 : vector<8x128xi1>, vector<8x128xf32>
    %220 = vector.extract_strided_slice %219 {offsets = [0, 0], sizes = [8, 32], strides = [1, 1]} : vector<8x128xf32> to vector<8x32xf32>
    %221 = vector.extract_strided_slice %219 {offsets = [0, 32], sizes = [8, 32], strides = [1, 1]} : vector<8x128xf32> to vector<8x32xf32>
    %222 = vector.extract_strided_slice %219 {offsets = [0, 64], sizes = [8, 32], strides = [1, 1]} : vector<8x128xf32> to vector<8x32xf32>
    %223 = vector.extract_strided_slice %219 {offsets = [0, 96], sizes = [8, 32], strides = [1, 1]} : vector<8x128xf32> to vector<8x32xf32>
    %224 = arith.mulf %221, %206 : vector<8x32xf32>
    %225 = arith.mulf %220, %222 : vector<8x32xf32>
    %226 = arith.addf %224, %225 : vector<8x32xf32>
    %227 = math.tanh %226 : vector<8x32xf32>
    %228 = arith.mulf %223, %227 : vector<8x32xf32>
    %c8_53 = arith.constant 8 : index
    %c0_54 = arith.constant 0 : index
    %229 = vector.load %arg20[%c8_53, %c0_54] : memref<64x32xf32, #tpu.memory_space<vmem>>, vector<8x32xf32>
    tpu.vector_store %arg20[%c8_53, %c0_54], %228 {strides = array<i32>} : memref<64x32xf32, #tpu.memory_space<vmem>>, vector<8x32xf32>,
    %230 = vector.extract_strided_slice %180 {offsets = [16, 0], sizes = [8, 128], strides = [1, 1]} : vector<64x128xf32> to vector<8x128xf32>
    %cst_55 = arith.constant dense<0.000000e+00> : vector<8x128xf32>
    %231 = tpu.matmul %228, %181, %cst_55 {dimension_numbers = #tpu.dot_dimension_numbers<[1], [0], [0], [1], [0, 0, 1, 1], [], []>} : vector<8x32xf32>, vector<32x128xf32>, vector<8x128xf32> -> vector<8x128xf32>
    %232 = arith.addf %230, %231 : vector<8x128xf32>
    %233 = math.tanh %232 : vector<8x128xf32>
    %234 = arith.negf %232 : vector<8x128xf32>
    %235 = math.exp %234 : vector<8x128xf32>
    %cst_56 = arith.constant 1.000000e+00 : f32
    %236 = vector.broadcast %cst_56 : f32 to vector<8x128xf32>
    %237 = arith.addf %236, %235 : vector<8x128xf32>
    %238 = arith.divf %236, %237 : vector<8x128xf32>
    %239 = arith.select %187, %233, %238 : vector<8x128xi1>, vector<8x128xf32>
    %240 = vector.extract_strided_slice %239 {offsets = [0, 0], sizes = [8, 32], strides = [1, 1]} : vector<8x128xf32> to vector<8x32xf32>
    %241 = vector.extract_strided_slice %239 {offsets = [0, 32], sizes = [8, 32], strides = [1, 1]} : vector<8x128xf32> to vector<8x32xf32>
    %242 = vector.extract_strided_slice %239 {offsets = [0, 64], sizes = [8, 32], strides = [1, 1]} : vector<8x128xf32> to vector<8x32xf32>
    %243 = vector.extract_strided_slice %239 {offsets = [0, 96], sizes = [8, 32], strides = [1, 1]} : vector<8x128xf32> to vector<8x32xf32>
    %244 = arith.mulf %241, %226 : vector<8x32xf32>
    %245 = arith.mulf %240, %242 : vector<8x32xf32>
    %246 = arith.addf %244, %245 : vector<8x32xf32>
    %247 = math.tanh %246 : vector<8x32xf32>
    %248 = arith.mulf %243, %247 : vector<8x32xf32>
    %c16_57 = arith.constant 16 : index
    %c0_58 = arith.constant 0 : index
    %249 = vector.load %arg20[%c16_57, %c0_58] : memref<64x32xf32, #tpu.memory_space<vmem>>, vector<8x32xf32>
    tpu.vector_store %arg20[%c16_57, %c0_58], %248 {strides = array<i32>} : memref<64x32xf32, #tpu.memory_space<vmem>>, vector<8x32xf32>,
    %250 = vector.extract_strided_slice %180 {offsets = [24, 0], sizes = [8, 128], strides = [1, 1]} : vector<64x128xf32> to vector<8x128xf32>
    %cst_59 = arith.constant dense<0.000000e+00> : vector<8x128xf32>
    %251 = tpu.matmul %248, %181, %cst_59 {dimension_numbers = #tpu.dot_dimension_numbers<[1], [0], [0], [1], [0, 0, 1, 1], [], []>} : vector<8x32xf32>, vector<32x128xf32>, vector<8x128xf32> -> vector<8x128xf32>
    %252 = arith.addf %250, %251 : vector<8x128xf32>
    %253 = math.tanh %252 : vector<8x128xf32>
    %254 = arith.negf %252 : vector<8x128xf32>
    %255 = math.exp %254 : vector<8x128xf32>
    %cst_60 = arith.constant 1.000000e+00 : f32
    %256 = vector.broadcast %cst_60 : f32 to vector<8x128xf32>
    %257 = arith.addf %256, %255 : vector<8x128xf32>
    %258 = arith.divf %256, %257 : vector<8x128xf32>
    %259 = arith.select %187, %253, %258 : vector<8x128xi1>, vector<8x128xf32>
    %260 = vector.extract_strided_slice %259 {offsets = [0, 0], sizes = [8, 32], strides = [1, 1]} : vector<8x128xf32> to vector<8x32xf32>
    %261 = vector.extract_strided_slice %259 {offsets = [0, 32], sizes = [8, 32], strides = [1, 1]} : vector<8x128xf32> to vector<8x32xf32>
    %262 = vector.extract_strided_slice %259 {offsets = [0, 64], sizes = [8, 32], strides = [1, 1]} : vector<8x128xf32> to vector<8x32xf32>
    %263 = vector.extract_strided_slice %259 {offsets = [0, 96], sizes = [8, 32], strides = [1, 1]} : vector<8x128xf32> to vector<8x32xf32>
    %264 = arith.mulf %261, %246 : vector<8x32xf32>
    %265 = arith.mulf %260, %262 : vector<8x32xf32>
    %266 = arith.addf %264, %265 : vector<8x32xf32>
    %267 = math.tanh %266 : vector<8x32xf32>
    %268 = arith.mulf %263, %267 : vector<8x32xf32>
    %c24_61 = arith.constant 24 : index
    %c0_62 = arith.constant 0 : index
    %269 = vector.load %arg20[%c24_61, %c0_62] : memref<64x32xf32, #tpu.memory_space<vmem>>, vector<8x32xf32>
    tpu.vector_store %arg20[%c24_61, %c0_62], %268 {strides = array<i32>} : memref<64x32xf32, #tpu.memory_space<vmem>>, vector<8x32xf32>,
    %270 = vector.extract_strided_slice %180 {offsets = [32, 0], sizes = [8, 128], strides = [1, 1]} : vector<64x128xf32> to vector<8x128xf32>
    %cst_63 = arith.constant dense<0.000000e+00> : vector<8x128xf32>
    %271 = tpu.matmul %268, %181, %cst_63 {dimension_numbers = #tpu.dot_dimension_numbers<[1], [0], [0], [1], [0, 0, 1, 1], [], []>} : vector<8x32xf32>, vector<32x128xf32>, vector<8x128xf32> -> vector<8x128xf32>
    %272 = arith.addf %270, %271 : vector<8x128xf32>
    %273 = math.tanh %272 : vector<8x128xf32>
    %274 = arith.negf %272 : vector<8x128xf32>
    %275 = math.exp %274 : vector<8x128xf32>
    %cst_64 = arith.constant 1.000000e+00 : f32
    %276 = vector.broadcast %cst_64 : f32 to vector<8x128xf32>
    %277 = arith.addf %276, %275 : vector<8x128xf32>
    %278 = arith.divf %276, %277 : vector<8x128xf32>
    %279 = arith.select %187, %273, %278 : vector<8x128xi1>, vector<8x128xf32>
    %280 = vector.extract_strided_slice %279 {offsets = [0, 0], sizes = [8, 32], strides = [1, 1]} : vector<8x128xf32> to vector<8x32xf32>
    %281 = vector.extract_strided_slice %279 {offsets = [0, 32], sizes = [8, 32], strides = [1, 1]} : vector<8x128xf32> to vector<8x32xf32>
    %282 = vector.extract_strided_slice %279 {offsets = [0, 64], sizes = [8, 32], strides = [1, 1]} : vector<8x128xf32> to vector<8x32xf32>
    %283 = vector.extract_strided_slice %279 {offsets = [0, 96], sizes = [8, 32], strides = [1, 1]} : vector<8x128xf32> to vector<8x32xf32>
    %284 = arith.mulf %281, %266 : vector<8x32xf32>
    %285 = arith.mulf %280, %282 : vector<8x32xf32>
    %286 = arith.addf %284, %285 : vector<8x32xf32>
    %287 = math.tanh %286 : vector<8x32xf32>
    %288 = arith.mulf %283, %287 : vector<8x32xf32>
    %c32_65 = arith.constant 32 : index
    %c0_66 = arith.constant 0 : index
    %289 = vector.load %arg20[%c32_65, %c0_66] : memref<64x32xf32, #tpu.memory_space<vmem>>, vector<8x32xf32>
    tpu.vector_store %arg20[%c32_65, %c0_66], %288 {strides = array<i32>} : memref<64x32xf32, #tpu.memory_space<vmem>>, vector<8x32xf32>,
    %290 = vector.extract_strided_slice %180 {offsets = [40, 0], sizes = [8, 128], strides = [1, 1]} : vector<64x128xf32> to vector<8x128xf32>
    %cst_67 = arith.constant dense<0.000000e+00> : vector<8x128xf32>
    %291 = tpu.matmul %288, %181, %cst_67 {dimension_numbers = #tpu.dot_dimension_numbers<[1], [0], [0], [1], [0, 0, 1, 1], [], []>} : vector<8x32xf32>, vector<32x128xf32>, vector<8x128xf32> -> vector<8x128xf32>
    %292 = arith.addf %290, %291 : vector<8x128xf32>
    %293 = math.tanh %292 : vector<8x128xf32>
    %294 = arith.negf %292 : vector<8x128xf32>
    %295 = math.exp %294 : vector<8x128xf32>
    %cst_68 = arith.constant 1.000000e+00 : f32
    %296 = vector.broadcast %cst_68 : f32 to vector<8x128xf32>
    %297 = arith.addf %296, %295 : vector<8x128xf32>
    %298 = arith.divf %296, %297 : vector<8x128xf32>
    %299 = arith.select %187, %293, %298 : vector<8x128xi1>, vector<8x128xf32>
    %300 = vector.extract_strided_slice %299 {offsets = [0, 0], sizes = [8, 32], strides = [1, 1]} : vector<8x128xf32> to vector<8x32xf32>
    %301 = vector.extract_strided_slice %299 {offsets = [0, 32], sizes = [8, 32], strides = [1, 1]} : vector<8x128xf32> to vector<8x32xf32>
    %302 = vector.extract_strided_slice %299 {offsets = [0, 64], sizes = [8, 32], strides = [1, 1]} : vector<8x128xf32> to vector<8x32xf32>
    %303 = vector.extract_strided_slice %299 {offsets = [0, 96], sizes = [8, 32], strides = [1, 1]} : vector<8x128xf32> to vector<8x32xf32>
    %304 = arith.mulf %301, %286 : vector<8x32xf32>
    %305 = arith.mulf %300, %302 : vector<8x32xf32>
    %306 = arith.addf %304, %305 : vector<8x32xf32>
    %307 = math.tanh %306 : vector<8x32xf32>
    %308 = arith.mulf %303, %307 : vector<8x32xf32>
    %c40_69 = arith.constant 40 : index
    %c0_70 = arith.constant 0 : index
    %309 = vector.load %arg20[%c40_69, %c0_70] : memref<64x32xf32, #tpu.memory_space<vmem>>, vector<8x32xf32>
    tpu.vector_store %arg20[%c40_69, %c0_70], %308 {strides = array<i32>} : memref<64x32xf32, #tpu.memory_space<vmem>>, vector<8x32xf32>,
    %310 = vector.extract_strided_slice %180 {offsets = [48, 0], sizes = [8, 128], strides = [1, 1]} : vector<64x128xf32> to vector<8x128xf32>
    %cst_71 = arith.constant dense<0.000000e+00> : vector<8x128xf32>
    %311 = tpu.matmul %308, %181, %cst_71 {dimension_numbers = #tpu.dot_dimension_numbers<[1], [0], [0], [1], [0, 0, 1, 1], [], []>} : vector<8x32xf32>, vector<32x128xf32>, vector<8x128xf32> -> vector<8x128xf32>
    %312 = arith.addf %310, %311 : vector<8x128xf32>
    %313 = math.tanh %312 : vector<8x128xf32>
    %314 = arith.negf %312 : vector<8x128xf32>
    %315 = math.exp %314 : vector<8x128xf32>
    %cst_72 = arith.constant 1.000000e+00 : f32
    %316 = vector.broadcast %cst_72 : f32 to vector<8x128xf32>
    %317 = arith.addf %316, %315 : vector<8x128xf32>
    %318 = arith.divf %316, %317 : vector<8x128xf32>
    %319 = arith.select %187, %313, %318 : vector<8x128xi1>, vector<8x128xf32>
    %320 = vector.extract_strided_slice %319 {offsets = [0, 0], sizes = [8, 32], strides = [1, 1]} : vector<8x128xf32> to vector<8x32xf32>
    %321 = vector.extract_strided_slice %319 {offsets = [0, 32], sizes = [8, 32], strides = [1, 1]} : vector<8x128xf32> to vector<8x32xf32>
    %322 = vector.extract_strided_slice %319 {offsets = [0, 64], sizes = [8, 32], strides = [1, 1]} : vector<8x128xf32> to vector<8x32xf32>
    %323 = vector.extract_strided_slice %319 {offsets = [0, 96], sizes = [8, 32], strides = [1, 1]} : vector<8x128xf32> to vector<8x32xf32>
    %324 = arith.mulf %321, %306 : vector<8x32xf32>
    %325 = arith.mulf %320, %322 : vector<8x32xf32>
    %326 = arith.addf %324, %325 : vector<8x32xf32>
    %327 = math.tanh %326 : vector<8x32xf32>
    %328 = arith.mulf %323, %327 : vector<8x32xf32>
    %c48_73 = arith.constant 48 : index
    %c0_74 = arith.constant 0 : index
    %329 = vector.load %arg20[%c48_73, %c0_74] : memref<64x32xf32, #tpu.memory_space<vmem>>, vector<8x32xf32>
    tpu.vector_store %arg20[%c48_73, %c0_74], %328 {strides = array<i32>} : memref<64x32xf32, #tpu.memory_space<vmem>>, vector<8x32xf32>,
    %330 = vector.extract_strided_slice %180 {offsets = [56, 0], sizes = [8, 128], strides = [1, 1]} : vector<64x128xf32> to vector<8x128xf32>
    %cst_75 = arith.constant dense<0.000000e+00> : vector<8x128xf32>
    %331 = tpu.matmul %328, %181, %cst_75 {dimension_numbers = #tpu.dot_dimension_numbers<[1], [0], [0], [1], [0, 0, 1, 1], [], []>} : vector<8x32xf32>, vector<32x128xf32>, vector<8x128xf32> -> vector<8x128xf32>
    %332 = arith.addf %330, %331 : vector<8x128xf32>
    %333 = math.tanh %332 : vector<8x128xf32>
    %334 = arith.negf %332 : vector<8x128xf32>
    %335 = math.exp %334 : vector<8x128xf32>
    %cst_76 = arith.constant 1.000000e+00 : f32
    %336 = vector.broadcast %cst_76 : f32 to vector<8x128xf32>
    %337 = arith.addf %336, %335 : vector<8x128xf32>
    %338 = arith.divf %336, %337 : vector<8x128xf32>
    %339 = arith.select %187, %333, %338 : vector<8x128xi1>, vector<8x128xf32>
    %340 = vector.extract_strided_slice %339 {offsets = [0, 0], sizes = [8, 32], strides = [1, 1]} : vector<8x128xf32> to vector<8x32xf32>
    %341 = vector.extract_strided_slice %339 {offsets = [0, 32], sizes = [8, 32], strides = [1, 1]} : vector<8x128xf32> to vector<8x32xf32>
    %342 = vector.extract_strided_slice %339 {offsets = [0, 64], sizes = [8, 32], strides = [1, 1]} : vector<8x128xf32> to vector<8x32xf32>
    %343 = vector.extract_strided_slice %339 {offsets = [0, 96], sizes = [8, 32], strides = [1, 1]} : vector<8x128xf32> to vector<8x32xf32>
    %344 = arith.mulf %341, %326 : vector<8x32xf32>
    %345 = arith.mulf %340, %342 : vector<8x32xf32>
    %346 = arith.addf %344, %345 : vector<8x32xf32>
    %347 = math.tanh %346 : vector<8x32xf32>
    %348 = arith.mulf %343, %347 : vector<8x32xf32>
    %c56_77 = arith.constant 56 : index
    %c0_78 = arith.constant 0 : index
    %349 = vector.load %arg20[%c56_77, %c0_78] : memref<64x32xf32, #tpu.memory_space<vmem>>, vector<8x32xf32>
    tpu.vector_store %arg20[%c56_77, %c0_78], %348 {strides = array<i32>} : memref<64x32xf32, #tpu.memory_space<vmem>>, vector<8x32xf32>,
    %c0_79 = arith.constant 0 : index
    %c0_80 = arith.constant 0 : index
    %350 = vector.load %arg20[%c0_79, %c0_80] : memref<64x32xf32, #tpu.memory_space<vmem>>, vector<64x32xf32>
    %c0_81 = arith.constant 0 : index
    %c0_82 = arith.constant 0 : index
    %351 = vector.load %arg7[%c0_81, %c0_82] : memref<1x32xf32, #tpu.memory_space<vmem>>, vector<1x32xf32>
    %c0_83 = arith.constant 0 : index
    %c0_84 = arith.constant 0 : index
    %352 = vector.load %arg8[%c0_83, %c0_84] : memref<1x32xf32, #tpu.memory_space<vmem>>, vector<1x32xf32>
    %cst_85 = arith.constant dense<0.000000e+00> : vector<64xf32>
    %353 = vector.multi_reduction <add>, %350, %cst_85 [1] : vector<64x32xf32> to vector<64xf32>
    %354 = vector.shape_cast %353 : vector<64xf32> to vector<64x1xf32>
    %cst_86 = arith.constant 3.200000e+01 : f32
    %355 = vector.broadcast %cst_86 : f32 to vector<64x1xf32>
    %356 = arith.divf %354, %355 : vector<64x1xf32>
    %357 = vector.broadcast %356 : vector<64x1xf32> to vector<64x32xf32>
    %358 = arith.subf %350, %357 : vector<64x32xf32>
    %359 = arith.mulf %358, %358 : vector<64x32xf32>
    %cst_87 = arith.constant dense<0.000000e+00> : vector<64xf32>
    %360 = vector.multi_reduction <add>, %359, %cst_87 [1] : vector<64x32xf32> to vector<64xf32>
    %361 = vector.shape_cast %360 : vector<64xf32> to vector<64x1xf32>
    %cst_88 = arith.constant 3.200000e+01 : f32
    %362 = vector.broadcast %cst_88 : f32 to vector<64x1xf32>
    %363 = arith.divf %361, %362 : vector<64x1xf32>
    %364 = vector.broadcast %356 : vector<64x1xf32> to vector<64x32xf32>
    %365 = arith.subf %350, %364 : vector<64x32xf32>
    %cst_89 = arith.constant 9.99999974E-6 : f32
    %366 = vector.broadcast %cst_89 : f32 to vector<64x1xf32>
    %367 = arith.addf %363, %366 : vector<64x1xf32>
    %368 = math.rsqrt %367 : vector<64x1xf32>
    %369 = vector.broadcast %368 : vector<64x1xf32> to vector<64x32xf32>
    %370 = arith.mulf %365, %369 : vector<64x32xf32>
    %371 = vector.broadcast %351 : vector<1x32xf32> to vector<64x32xf32>
    %372 = arith.mulf %370, %371 : vector<64x32xf32>
    %373 = vector.broadcast %352 : vector<1x32xf32> to vector<64x32xf32>
    %374 = arith.addf %372, %373 : vector<64x32xf32>
    %c0_90 = arith.constant 0 : index
    %c0_91 = arith.constant 0 : index
    %375 = vector.load %arg9[%c0_90, %c0_91] : memref<32x32xf32, #tpu.memory_space<vmem>>, vector<32x32xf32>
    %cst_92 = arith.constant dense<0.000000e+00> : vector<64x32xf32>
    %376 = tpu.matmul %374, %375, %cst_92 {dimension_numbers = #tpu.dot_dimension_numbers<[1], [0], [0], [1], [0, 0, 1, 1], [], []>} : vector<64x32xf32>, vector<32x32xf32>, vector<64x32xf32> -> vector<64x32xf32>
    %c0_93 = arith.constant 0 : index
    %c0_94 = arith.constant 0 : index
    %377 = vector.load %arg10[%c0_93, %c0_94] : memref<1x32xf32, #tpu.memory_space<vmem>>, vector<1x32xf32>
    %378 = vector.broadcast %377 : vector<1x32xf32> to vector<64x32xf32>
    %379 = arith.addf %376, %378 : vector<64x32xf32>
    %380 = math.tanh %379 : vector<64x32xf32>
    %c0_95 = arith.constant 0 : index
    %c0_96 = arith.constant 0 : index
    %381 = vector.load %arg11[%c0_95, %c0_96] : memref<1x32xf32, #tpu.memory_space<vmem>>, vector<1x32xf32>
    %382 = vector.broadcast %381 : vector<1x32xf32> to vector<64x32xf32>
    %383 = arith.mulf %380, %382 : vector<64x32xf32>
    %cst_97 = arith.constant dense<0.000000e+00> : vector<64xf32>
    %384 = vector.multi_reduction <add>, %383, %cst_97 [1] : vector<64x32xf32> to vector<64xf32>
    %385 = vector.shape_cast %384 : vector<64xf32> to vector<64x1xf32>
    %c0_98 = arith.constant 0 : index
    %c0_99 = arith.constant 0 : index
    %386 = vector.load %arg12[%c0_98, %c0_99] : memref<1x1xf32, #tpu.memory_space<vmem>>, vector<1x1xf32>
    %387 = vector.broadcast %386 : vector<1x1xf32> to vector<64x1xf32>
    %388 = arith.addf %385, %387 : vector<64x1xf32>
    %389 = vector.extract_strided_slice %388 {offsets = [0, 0], sizes = [8, 1], strides = [1, 1]} : vector<64x1xf32> to vector<8x1xf32>
    %390 = vector.extract_strided_slice %388 {offsets = [8, 0], sizes = [8, 1], strides = [1, 1]} : vector<64x1xf32> to vector<8x1xf32>
    %391 = vector.extract_strided_slice %388 {offsets = [16, 0], sizes = [8, 1], strides = [1, 1]} : vector<64x1xf32> to vector<8x1xf32>
    %392 = vector.extract_strided_slice %388 {offsets = [24, 0], sizes = [8, 1], strides = [1, 1]} : vector<64x1xf32> to vector<8x1xf32>
    %393 = vector.extract_strided_slice %388 {offsets = [32, 0], sizes = [8, 1], strides = [1, 1]} : vector<64x1xf32> to vector<8x1xf32>
    %394 = vector.extract_strided_slice %388 {offsets = [40, 0], sizes = [8, 1], strides = [1, 1]} : vector<64x1xf32> to vector<8x1xf32>
    %395 = vector.extract_strided_slice %388 {offsets = [48, 0], sizes = [8, 1], strides = [1, 1]} : vector<64x1xf32> to vector<8x1xf32>
    %396 = vector.extract_strided_slice %388 {offsets = [56, 0], sizes = [8, 1], strides = [1, 1]} : vector<64x1xf32> to vector<8x1xf32>
    %397 = arith.maximumf %389, %390 : vector<8x1xf32>
    %398 = arith.maximumf %397, %391 : vector<8x1xf32>
    %399 = arith.maximumf %398, %392 : vector<8x1xf32>
    %400 = arith.maximumf %399, %393 : vector<8x1xf32>
    %401 = arith.maximumf %400, %394 : vector<8x1xf32>
    %402 = arith.maximumf %401, %395 : vector<8x1xf32>
    %403 = arith.maximumf %402, %396 : vector<8x1xf32>
    %404 = arith.subf %389, %403 : vector<8x1xf32>
    %405 = math.exp %404 : vector<8x1xf32>
    %406 = arith.subf %390, %403 : vector<8x1xf32>
    %407 = math.exp %406 : vector<8x1xf32>
    %408 = arith.subf %391, %403 : vector<8x1xf32>
    %409 = math.exp %408 : vector<8x1xf32>
    %410 = arith.subf %392, %403 : vector<8x1xf32>
    %411 = math.exp %410 : vector<8x1xf32>
    %412 = arith.subf %393, %403 : vector<8x1xf32>
    %413 = math.exp %412 : vector<8x1xf32>
    %414 = arith.subf %394, %403 : vector<8x1xf32>
    %415 = math.exp %414 : vector<8x1xf32>
    %416 = arith.subf %395, %403 : vector<8x1xf32>
    %417 = math.exp %416 : vector<8x1xf32>
    %418 = arith.subf %396, %403 : vector<8x1xf32>
    %419 = math.exp %418 : vector<8x1xf32>
    %420 = arith.addf %405, %407 : vector<8x1xf32>
    %421 = arith.addf %420, %409 : vector<8x1xf32>
    %422 = arith.addf %421, %411 : vector<8x1xf32>
    %423 = arith.addf %422, %413 : vector<8x1xf32>
    %424 = arith.addf %423, %415 : vector<8x1xf32>
    %425 = arith.addf %424, %417 : vector<8x1xf32>
    %426 = arith.addf %425, %419 : vector<8x1xf32>
    %cst_100 = arith.constant 1.000000e+00 : f32
    %427 = vector.broadcast %cst_100 : f32 to vector<8x1xf32>
    %428 = arith.divf %427, %426 : vector<8x1xf32>
    %cst_101 = arith.constant 0.000000e+00 : f32
    %429 = vector.broadcast %cst_101 : f32 to vector<8x32xf32>
    %430 = arith.mulf %405, %428 : vector<8x1xf32>
    %431 = vector.extract_strided_slice %374 {offsets = [0, 0], sizes = [8, 32], strides = [1, 1]} : vector<64x32xf32> to vector<8x32xf32>
    %432 = vector.broadcast %430 : vector<8x1xf32> to vector<8x32xf32>
    %433 = arith.mulf %432, %431 : vector<8x32xf32>
    %434 = arith.addf %429, %433 : vector<8x32xf32>
    %435 = arith.mulf %407, %428 : vector<8x1xf32>
    %436 = vector.extract_strided_slice %374 {offsets = [8, 0], sizes = [8, 32], strides = [1, 1]} : vector<64x32xf32> to vector<8x32xf32>
    %437 = vector.broadcast %435 : vector<8x1xf32> to vector<8x32xf32>
    %438 = arith.mulf %437, %436 : vector<8x32xf32>
    %439 = arith.addf %434, %438 : vector<8x32xf32>
    %440 = arith.mulf %409, %428 : vector<8x1xf32>
    %441 = vector.extract_strided_slice %374 {offsets = [16, 0], sizes = [8, 32], strides = [1, 1]} : vector<64x32xf32> to vector<8x32xf32>
    %442 = vector.broadcast %440 : vector<8x1xf32> to vector<8x32xf32>
    %443 = arith.mulf %442, %441 : vector<8x32xf32>
    %444 = arith.addf %439, %443 : vector<8x32xf32>
    %445 = arith.mulf %411, %428 : vector<8x1xf32>
    %446 = vector.extract_strided_slice %374 {offsets = [24, 0], sizes = [8, 32], strides = [1, 1]} : vector<64x32xf32> to vector<8x32xf32>
    %447 = vector.broadcast %445 : vector<8x1xf32> to vector<8x32xf32>
    %448 = arith.mulf %447, %446 : vector<8x32xf32>
    %449 = arith.addf %444, %448 : vector<8x32xf32>
    %450 = arith.mulf %413, %428 : vector<8x1xf32>
    %451 = vector.extract_strided_slice %374 {offsets = [32, 0], sizes = [8, 32], strides = [1, 1]} : vector<64x32xf32> to vector<8x32xf32>
    %452 = vector.broadcast %450 : vector<8x1xf32> to vector<8x32xf32>
    %453 = arith.mulf %452, %451 : vector<8x32xf32>
    %454 = arith.addf %449, %453 : vector<8x32xf32>
    %455 = arith.mulf %415, %428 : vector<8x1xf32>
    %456 = vector.extract_strided_slice %374 {offsets = [40, 0], sizes = [8, 32], strides = [1, 1]} : vector<64x32xf32> to vector<8x32xf32>
    %457 = vector.broadcast %455 : vector<8x1xf32> to vector<8x32xf32>
    %458 = arith.mulf %457, %456 : vector<8x32xf32>
    %459 = arith.addf %454, %458 : vector<8x32xf32>
    %460 = arith.mulf %417, %428 : vector<8x1xf32>
    %461 = vector.extract_strided_slice %374 {offsets = [48, 0], sizes = [8, 32], strides = [1, 1]} : vector<64x32xf32> to vector<8x32xf32>
    %462 = vector.broadcast %460 : vector<8x1xf32> to vector<8x32xf32>
    %463 = arith.mulf %462, %461 : vector<8x32xf32>
    %464 = arith.addf %459, %463 : vector<8x32xf32>
    %465 = arith.mulf %419, %428 : vector<8x1xf32>
    %466 = vector.extract_strided_slice %374 {offsets = [56, 0], sizes = [8, 32], strides = [1, 1]} : vector<64x32xf32> to vector<8x32xf32>
    %467 = vector.broadcast %465 : vector<8x1xf32> to vector<8x32xf32>
    %468 = arith.mulf %467, %466 : vector<8x32xf32>
    %469 = arith.addf %464, %468 : vector<8x32xf32>
    %c0_102 = arith.constant 0 : index
    %c0_103 = arith.constant 0 : index
    %470 = vector.load %arg13[%c0_102, %c0_103] : memref<32x32xf32, #tpu.memory_space<vmem>>, vector<32x32xf32>
    %cst_104 = arith.constant dense<0.000000e+00> : vector<8x32xf32>
    %471 = tpu.matmul %469, %470, %cst_104 {dimension_numbers = #tpu.dot_dimension_numbers<[1], [0], [0], [1], [0, 0, 1, 1], [], []>} : vector<8x32xf32>, vector<32x32xf32>, vector<8x32xf32> -> vector<8x32xf32>
    %c0_105 = arith.constant 0 : index
    %c0_106 = arith.constant 0 : index
    %472 = vector.load %arg14[%c0_105, %c0_106] : memref<1x32xf32, #tpu.memory_space<vmem>>, vector<1x32xf32>
    %473 = vector.broadcast %472 : vector<1x32xf32> to vector<8x32xf32>
    %474 = arith.addf %471, %473 : vector<8x32xf32>
    %c0_107 = arith.constant 0 : index
    %c0_108 = arith.constant 0 : index
    %475 = vector.load %arg15[%c0_107, %c0_108] : memref<1x32xf32, #tpu.memory_space<vmem>>, vector<1x32xf32>
    %c0_109 = arith.constant 0 : index
    %c0_110 = arith.constant 0 : index
    %476 = vector.load %arg16[%c0_109, %c0_110] : memref<1x32xf32, #tpu.memory_space<vmem>>, vector<1x32xf32>
    %cst_111 = arith.constant dense<0.000000e+00> : vector<8xf32>
    %477 = vector.multi_reduction <add>, %474, %cst_111 [1] : vector<8x32xf32> to vector<8xf32>
    %478 = vector.shape_cast %477 : vector<8xf32> to vector<8x1xf32>
    %cst_112 = arith.constant 3.200000e+01 : f32
    %479 = vector.broadcast %cst_112 : f32 to vector<8x1xf32>
    %480 = arith.divf %478, %479 : vector<8x1xf32>
    %481 = vector.broadcast %480 : vector<8x1xf32> to vector<8x32xf32>
    %482 = arith.subf %474, %481 : vector<8x32xf32>
    %483 = arith.mulf %482, %482 : vector<8x32xf32>
    %cst_113 = arith.constant dense<0.000000e+00> : vector<8xf32>
    %484 = vector.multi_reduction <add>, %483, %cst_113 [1] : vector<8x32xf32> to vector<8xf32>
    %485 = vector.shape_cast %484 : vector<8xf32> to vector<8x1xf32>
    %cst_114 = arith.constant 3.200000e+01 : f32
    %486 = vector.broadcast %cst_114 : f32 to vector<8x1xf32>
    %487 = arith.divf %485, %486 : vector<8x1xf32>
    %488 = vector.broadcast %480 : vector<8x1xf32> to vector<8x32xf32>
    %489 = arith.subf %474, %488 : vector<8x32xf32>
    %cst_115 = arith.constant 9.99999974E-6 : f32
    %490 = vector.broadcast %cst_115 : f32 to vector<8x1xf32>
    %491 = arith.addf %487, %490 : vector<8x1xf32>
    %492 = math.rsqrt %491 : vector<8x1xf32>
    %493 = vector.broadcast %492 : vector<8x1xf32> to vector<8x32xf32>
    %494 = arith.mulf %489, %493 : vector<8x32xf32>
    %495 = vector.broadcast %475 : vector<1x32xf32> to vector<8x32xf32>
    %496 = arith.mulf %494, %495 : vector<8x32xf32>
    %497 = vector.broadcast %476 : vector<1x32xf32> to vector<8x32xf32>
    %498 = arith.addf %496, %497 : vector<8x32xf32>
    %cst_116 = arith.constant 0.000000e+00 : f32
    %499 = vector.broadcast %cst_116 : f32 to vector<8x32xf32>
    %500 = arith.maximumf %498, %499 : vector<8x32xf32>
    %c0_117 = arith.constant 0 : index
    %c0_118 = arith.constant 0 : index
    %501 = vector.load %arg17[%c0_117, %c0_118] : memref<32x1xf32, #tpu.memory_space<vmem>>, vector<32x1xf32>
    %cst_119 = arith.constant dense<0.000000e+00> : vector<8x1xf32>
    %502 = tpu.matmul %500, %501, %cst_119 {dimension_numbers = #tpu.dot_dimension_numbers<[1], [0], [0], [1], [0, 0, 1, 1], [], []>} : vector<8x32xf32>, vector<32x1xf32>, vector<8x1xf32> -> vector<8x1xf32>
    %c0_120 = arith.constant 0 : index
    %c0_121 = arith.constant 0 : index
    %503 = vector.load %arg18[%c0_120, %c0_121] : memref<1x1xf32, #tpu.memory_space<vmem>>, vector<1x1xf32>
    %504 = vector.broadcast %503 : vector<1x1xf32> to vector<8x1xf32>
    %505 = arith.addf %502, %504 : vector<8x1xf32>
    %506 = arith.negf %505 : vector<8x1xf32>
    %507 = math.exp %506 : vector<8x1xf32>
    %cst_122 = arith.constant 1.000000e+00 : f32
    %508 = vector.broadcast %cst_122 : f32 to vector<8x1xf32>
    %509 = arith.addf %508, %507 : vector<8x1xf32>
    %510 = arith.divf %508, %509 : vector<8x1xf32>
    %c0_123 = arith.constant 0 : index
    %c0_124 = arith.constant 0 : index
    %511 = vector.load %arg19[%c0_123, %c0_124] : memref<8x1xf32, #tpu.memory_space<vmem>>, vector<8x1xf32>
    tpu.vector_store %arg19[%c0_123, %c0_124], %510 {strides = array<i32>} : memref<8x1xf32, #tpu.memory_space<vmem>>, vector<8x1xf32>,
    return
  }
}

</mosaic_0001>

<llo_original>
// kernel: lstm_model_forward.1
$region0: #{lstm_model_forward.1}
  #allocation0 [shape = 'u32[]', space=smem, size = 0x4, offset = 0x4, fixed_abs, tag = 'smem constant byte address 0x4 - core index']
  #allocation1 [shape = 'u32[72,128]{1,0:T(1,128)}', space=vmem, size = 0x9000, scoped, tag = 'internal scratch']
  #allocation2 [shape = 'f32[64,32]{1,0:T(8,128)}', space=vmem, size = 0x8000, scoped, tag = 'scratch operand']
  #allocation3 [shape = 'f32[1,1]{1,0:T(1,128)S(1)}', space=vmem, size = 0x200, scoped, tag = 'scoped memory for lstm_model_forward.1']
  #allocation4 [shape = 'f32[1,1]{1,0:T(1,128)S(1)}', space=vmem, size = 0x200, scoped, tag = 'scoped memory for lstm_model_forward.1']
  %s0 = inlined_call_operand.vmem [shape: f32[64,8], index: 0, kind: input, shape index: {}]
  %s1 = inlined_call_operand.vmem [shape: f32[8,128], index: 1, kind: input, shape index: {}]
  %s2 = inlined_call_operand.vmem [shape: f32[32,128], index: 2, kind: input, shape index: {}]
  %s3 = inlined_call_operand.vmem [shape: f32[1,128], index: 3, kind: input, shape index: {}]
  %s4 = inlined_call_operand.vmem [shape: f32[32,128], index: 4, kind: input, shape index: {}]
  %s5 = inlined_call_operand.vmem [shape: f32[32,128], index: 5, kind: input, shape index: {}]
  %s6 = inlined_call_operand.vmem [shape: f32[1,128], index: 6, kind: input, shape index: {}]
  %s7 = inlined_call_operand.vmem [shape: f32[1,32], index: 7, kind: input, shape index: {}]
  %s8 = inlined_call_operand.vmem [shape: f32[1,32], index: 8, kind: input, shape index: {}]
  %s9 = inlined_call_operand.vmem [shape: f32[32,32], index: 9, kind: input, shape index: {}]
  %s10 = inlined_call_operand.vmem [shape: f32[1,32], index: 10, kind: input, shape index: {}]
  %s11 = inlined_call_operand.vmem [shape: f32[1,32], index: 11, kind: input, shape index: {}]
  %s12 = inlined_call_operand.<no memory space> [shape: f32[1,1], index: 12, kind: input, shape index: {}]
  %s13 = inlined_call_operand.vmem [shape: f32[32,32], index: 13, kind: input, shape index: {}]
  %s14 = inlined_call_operand.vmem [shape: f32[1,32], index: 14, kind: input, shape index: {}]
  %s15 = inlined_call_operand.vmem [shape: f32[1,32], index: 15, kind: input, shape index: {}]
  %s16 = inlined_call_operand.vmem [shape: f32[1,32], index: 16, kind: input, shape index: {}]
  %s17 = inlined_call_operand.vmem [shape: f32[32,1], index: 17, kind: input, shape index: {}]
  %s18 = inlined_call_operand.<no memory space> [shape: f32[1,1], index: 18, kind: input, shape index: {}]
  %s19 = inlined_call_operand.vmem [shape: f32[8,1], index: 19, kind: output, shape index: {}]
  %s20 = sld [smem:[#allocation0]]
  $region86: #{lstm_model_forward.1} parent=0
    _
  %s22 = ssub.s32 1, %s20
  %s23 = scalar_select 0, %s22, %s20
  %v24 = vstv %s12
  %25 = vst [vmem:[#allocation3] sm:$0x1] %v24
  %v26 = vstv %s18
  %27 = vst [vmem:[#allocation4] sm:$0x1] %v26
  // Predicated region
  $region2: #{lstm_model_forward.1} parent=0 // pred_check
    _
  $region3: #{lstm_model_forward.1} parent=0 // pred_check_branch
    %29 = sbr.rel (0) target = $region5
  $region4: #{lstm_model_forward.1} parent=0 // pred_region
    _
  $region5: #{lstm_model_forward.1} parent=0 // pred_fallthru
    _
  // Predicated region
  $region6: #{lstm_model_forward.1} parent=0 // pred_check
    _
  $region7: #{lstm_model_forward.1} parent=0 // pred_check_branch
    %31 = sbr.rel (0) target = $region9
  $region8: #{lstm_model_forward.1} parent=0 // pred_region
    _
  $region9: #{lstm_model_forward.1} parent=0 // pred_fallthru
    _
  // Predicated region
  $region10: #{lstm_model_forward.1} parent=0 // pred_check
    _
  $region11: #{lstm_model_forward.1} parent=0 // pred_check_branch
    %33 = sbr.rel (0) target = $region13
  $region12: #{lstm_model_forward.1} parent=0 // pred_region
    _
  $region13: #{lstm_model_forward.1} parent=0 // pred_fallthru
    _
  // Predicated region
  $region14: #{lstm_model_forward.1} parent=0 // pred_check
    _
  $region15: #{lstm_model_forward.1} parent=0 // pred_check_branch
    %35 = sbr.rel (0) target = $region17
  $region16: #{lstm_model_forward.1} parent=0 // pred_region
    _
  $region17: #{lstm_model_forward.1} parent=0 // pred_fallthru
    _
  // Predicated region
  $region18: #{lstm_model_forward.1} parent=0 // pred_check
    _
  $region19: #{lstm_model_forward.1} parent=0 // pred_check_branch
    %37 = sbr.rel (0) target = $region21
  $region20: #{lstm_model_forward.1} parent=0 // pred_region
    _
  $region21: #{lstm_model_forward.1} parent=0 // pred_fallthru
    _
  // Predicated region
  $region22: #{lstm_model_forward.1} parent=0 // pred_check
    _
  $region23: #{lstm_model_forward.1} parent=0 // pred_check_branch
    %39 = sbr.rel (0) target = $region25
  $region24: #{lstm_model_forward.1} parent=0 // pred_region
    _
  $region25: #{lstm_model_forward.1} parent=0 // pred_fallthru
    _
  // Predicated region
  $region26: #{lstm_model_forward.1} parent=0 // pred_check
    _
  $region27: #{lstm_model_forward.1} parent=0 // pred_check_branch
    %41 = sbr.rel (0) target = $region29
  $region28: #{lstm_model_forward.1} parent=0 // pred_region
    _
  $region29: #{lstm_model_forward.1} parent=0 // pred_fallthru
    _
  // Predicated region
  $region30: #{lstm_model_forward.1} parent=0 // pred_check
    _
  $region31: #{lstm_model_forward.1} parent=0 // pred_check_branch
    %43 = sbr.rel (0) target = $region33
  $region32: #{lstm_model_forward.1} parent=0 // pred_region
    _
  $region33: #{lstm_model_forward.1} parent=0 // pred_fallthru
    _
  // Predicated region
  $region34: #{lstm_model_forward.1} parent=0 // pred_check
    _
  $region35: #{lstm_model_forward.1} parent=0 // pred_check_branch
    %45 = sbr.rel (0) target = $region37
  $region36: #{lstm_model_forward.1} parent=0 // pred_region
    _
  $region37: #{lstm_model_forward.1} parent=0 // pred_fallthru
    _
  // Predicated region
  $region38: #{lstm_model_forward.1} parent=0 // pred_check
    _
  $region39: #{lstm_model_forward.1} parent=0 // pred_check_branch
    %47 = sbr.rel (0) target = $region41
  $region40: #{lstm_model_forward.1} parent=0 // pred_region
    _
  $region41: #{lstm_model_forward.1} parent=0 // pred_fallthru
    _
  // Predicated region
  $region42: #{lstm_model_forward.1} parent=0 // pred_check
    _
  $region43: #{lstm_model_forward.1} parent=0 // pred_check_branch
    %49 = sbr.rel (0) target = $region45
  $region44: #{lstm_model_forward.1} parent=0 // pred_region
    _
  $region45: #{lstm_model_forward.1} parent=0 // pred_fallthru
    _
  // Predicated region
  $region46: #{lstm_model_forward.1} parent=0 // pred_check
    _
  $region47: #{lstm_model_forward.1} parent=0 // pred_check_branch
    %51 = sbr.rel (0) target = $region49
  $region48: #{lstm_model_forward.1} parent=0 // pred_region
    _
  $region49: #{lstm_model_forward.1} parent=0 // pred_fallthru
    _
  // Predicated region
  $region50: #{lstm_model_forward.1} parent=0 // pred_check
    _
  $region51: #{lstm_model_forward.1} parent=0 // pred_check_branch
    %53 = sbr.rel (0) target = $region53
  $region52: #{lstm_model_forward.1} parent=0 // pred_region
    _
  $region53: #{lstm_model_forward.1} parent=0 // pred_fallthru
    _
  // Predicated region
  $region54: #{lstm_model_forward.1} parent=0 // pred_check
    _
  $region55: #{lstm_model_forward.1} parent=0 // pred_check_branch
    %55 = sbr.rel (0) target = $region57
  $region56: #{lstm_model_forward.1} parent=0 // pred_region
    _
  $region57: #{lstm_model_forward.1} parent=0 // pred_fallthru
    _
  // Predicated region
  $region58: #{lstm_model_forward.1} parent=0 // pred_check
    _
  $region59: #{lstm_model_forward.1} parent=0 // pred_check_branch
    %57 = sbr.rel (0) target = $region61
  $region60: #{lstm_model_forward.1} parent=0 // pred_region
    _
  $region61: #{lstm_model_forward.1} parent=0 // pred_fallthru
    _
  // Predicated region
  $region62: #{lstm_model_forward.1} parent=0 // pred_check
    _
  $region63: #{lstm_model_forward.1} parent=0 // pred_check_branch
    %59 = sbr.rel (0) target = $region65
  $region64: #{lstm_model_forward.1} parent=0 // pred_region
    _
  $region65: #{lstm_model_forward.1} parent=0 // pred_fallthru
    _
  // Predicated region
  $region66: #{lstm_model_forward.1} parent=0 // pred_check
    _
  $region67: #{lstm_model_forward.1} parent=0 // pred_check_branch
    %61 = sbr.rel (0) target = $region69
  $region68: #{lstm_model_forward.1} parent=0 // pred_region
    _
  $region69: #{lstm_model_forward.1} parent=0 // pred_fallthru
    _
  // Predicated region
  $region70: #{lstm_model_forward.1} parent=0 // pred_check
    _
  $region71: #{lstm_model_forward.1} parent=0 // pred_check_branch
    %63 = sbr.rel (0) target = $region73
  $region72: #{lstm_model_forward.1} parent=0 // pred_region
    _
  $region73: #{lstm_model_forward.1} parent=0 // pred_fallthru
    _
  // Predicated region
  $region74: #{lstm_model_forward.1} parent=0 // pred_check
    _
  $region75: #{lstm_model_forward.1} parent=0 // pred_check_branch
    %65 = sbr.rel (0) target = $region77
  $region76: #{lstm_model_forward.1} parent=0 // pred_region
    _
  $region77: #{lstm_model_forward.1} parent=0 // pred_fallthru
    _
  %v66 = vld [vmem:[%s0] sm:$0xff]
  %v67 = vld [vmem:[%s0 + $0x8] sm:$0xff]
  %v68 = vld [vmem:[%s0 + $0x10] sm:$0xff]
  %v69 = vld [vmem:[%s0 + $0x18] sm:$0xff]
  %v70 = vld [vmem:[%s0 + $0x20] sm:$0xff]
  %v71 = vld [vmem:[%s0 + $0x28] sm:$0xff]
  %v72 = vld [vmem:[%s0 + $0x30] sm:$0xff]
  %v73 = vld [vmem:[%s0 + $0x38] sm:$0xff]
  %v74 = vld [vmem:[%s1] sm:$0xff]
  %v75 = vld [vmem:[%s3] sm:$0x1]
  %v77 = vperm.slane %v75, 0
  %vm79 = vcmask 64512
  %v81 = vsel %vm79, %v66, 0
  %v84 = vsel %vm79, %v67, 0
  %v87 = vsel %vm79, %v68, 0
  %v90 = vsel %vm79, %v69, 0
  %v93 = vsel %vm79, %v70, 0
  %v96 = vsel %vm79, %v71, 0
  %v99 = vsel %vm79, %v72, 0
  %v102 = vsel %vm79, %v73, 0
  %104 = vmatpush.msra.mxu0 0.0
  %105 = vmatpush.msra.mxu0 0.0
  %106 = vmatpush.msra.mxu0 0.0
  %107 = vmatpush.msra.mxu0 0.0
  %108 = vmatpush.msra.mxu0 0.0
  %109 = vmatpush.msra.mxu0 0.0
  %110 = vmatpush.msra.mxu0 0.0
  %111 = vmatpush.msra.mxu0 0.0
  %112 = vmatpush.msra.mxu0 0.0
  %113 = vmatpush.msra.mxu0 0.0
  %114 = vmatpush.msra.mxu0 0.0
  %115 = vmatpush.msra.mxu0 0.0
  %116 = vmatpush.msra.mxu0 0.0
  %117 = vmatpush.msra.mxu0 0.0
  %118 = vmatpush.msra.mxu0 0.0
  %119 = vmatpush.msra.mxu0 %v74
  %120 = vmatmul.f32.gmra.mxu0 %v81
  %v121 = vpop.f32.mrf.mxu0
  %v122 = vadd.f32 %v77, %v121
  %123 = vmatmul.f32.gmra.mxu0 %v84
  %v124 = vpop.f32.mrf.mxu0
  %v125 = vadd.f32 %v77, %v124
  %126 = vmatmul.f32.gmra.mxu0 %v87
  %v127 = vpop.f32.mrf.mxu0
  %v128 = vadd.f32 %v77, %v127
  %129 = vmatmul.f32.gmra.mxu0 %v90
  %v130 = vpop.f32.mrf.mxu0
  %v131 = vadd.f32 %v77, %v130
  %132 = vmatmul.f32.gmra.mxu0 %v93
  %v133 = vpop.f32.mrf.mxu0
  %v134 = vadd.f32 %v77, %v133
  %135 = vmatmul.f32.gmra.mxu0 %v96
  %v136 = vpop.f32.mrf.mxu0
  %v137 = vadd.f32 %v77, %v136
  %138 = vmatmul.f32.gmra.mxu0 %v99
  %v139 = vpop.f32.mrf.mxu0
  %v140 = vadd.f32 %v77, %v139
  %141 = vmatmul.f32.gmra.mxu0 %v102
  %v142 = vpop.f32.mrf.mxu0
  %v143 = vadd.f32 %v77, %v142
  %144 = vdwg.mxu0
  %v145 = vld [vmem:[%s2] sm:$0xff]
  %v146 = vld [vmem:[%s2 + $0x8] sm:$0xff]
  %v147 = vld [vmem:[%s2 + $0x10] sm:$0xff]
  %v148 = vld [vmem:[%s2 + $0x18] sm:$0xff]
  %v149 = vlaneseq
  %v150 = vand.u32 %v149, 127
  %vm151 = vcmp.ge.s32.totalorder %v150, 64
  %vm152 = vcmp.lt.s32.totalorder %v150, 96
  %vm153 = vmand %vm151, %vm152
  %vm154 = vcmask 261120
  %v156 = vsel %vm154, 0.0, 0
  %158 = vmatpush.msra.mxu0 0.0
  %159 = vmatpush.msra.mxu0 0.0
  %160 = vmatpush.msra.mxu0 0.0
  %161 = vmatpush.msra.mxu0 0.0
  %162 = vmatpush.msra.mxu0 0.0
  %163 = vmatpush.msra.mxu0 0.0
  %164 = vmatpush.msra.mxu0 0.0
  %165 = vmatpush.msra.mxu0 0.0
  %166 = vmatpush.msra.mxu0 0.0
  %167 = vmatpush.msra.mxu0 0.0
  %168 = vmatpush.msra.mxu0 0.0
  %169 = vmatpush.msra.mxu0 0.0
  %170 = vmatpush.msra.mxu0 %v148
  %171 = vmatpush.msra.mxu0 %v147
  %172 = vmatpush.msra.mxu0 %v146
  %173 = vmatpush.msra.mxu0 %v145
  %174 = vmatmul.f32.gmra.mxu0 %v156
  %v175 = vpop.f32.mrf.mxu0
  %v176 = vadd.f32 0.0, %v175
  %177 = vdwg.mxu0
  %v178 = vadd.f32 %v122, %v176
  %v179 = vtanh.pop %v178
  %v180 = vxor.u32 %v178, 2147483648
  %v181 = vmul.f32 %v180, 1.442695
  %v182 = vpow.pop %v181
  %v183 = vadd.f32 %v182, 1.0
  %v184 = vrcp.pop %v183
  %v185 = vmul.f32 %v183, %v184
  %v186 = vsub.f32 1.0, %v185
  %v187 = vmul.f32 %v184, %v186
  %v188 = vadd.f32 %v184, %v187
  %vm189 = vweird.f32 %v183
  %vm190 = vweird.f32 %v184
  %vm191 = vmor %vm189, %vm190
  %v192 = vsel %vm191, %v184, %v188
  %v193 = vand.u32 2147483647, %v183
  %vm194 = vcmp.eq.f32.partialorder %v193, 8.507059e+37
  %v195 = vand.u32 %v183, 2147483648
  %v196 = vor.u32 1.1754944e-38, %v195
  %v197 = vsel %vm194, %v196, %v192
  %v198 = vmul.f32 1.0, %v197
  %v199 = vsel %vm153, %v179, %v198
  %v200 = vmul.f32 %v199, 0.0
  %202 = vrot.lane.b32.xlu0 %v199, 64
  %v203 = vpop.permute.xlu0 %202
  %v205 = vmul.f32 %v199, %v203
  %207 = vrot.lane.b32.xlu0 %v205, 32
  %v208 = vpop.permute.xlu0 %207
  %v210 = vadd.f32 %v200, %v208
  %v211 = vtanh.pop %v210
  %213 = vrot.lane.b32.xlu0 %v211, 64
  %v214 = vpop.permute.xlu0 %213
  %v216 = vmul.f32 %v199, %v214
  %218 = vrot.lane.b32.xlu0 %v216, 32
  %v219 = vpop.permute.xlu0 %218
  %221 = vst.msk [vmem:[#allocation2] sm:$0xff] %vm154, %v219
  %v222 = vsel %vm154, %v219, 0
  %224 = vmatpush.msra.mxu0 0.0
  %225 = vmatpush.msra.mxu0 0.0
  %226 = vmatpush.msra.mxu0 0.0
  %227 = vmatpush.msra.mxu0 0.0
  %228 = vmatpush.msra.mxu0 0.0
  %229 = vmatpush.msra.mxu0 0.0
  %230 = vmatpush.msra.mxu0 0.0
  %231 = vmatpush.msra.mxu0 0.0
  %232 = vmatpush.msra.mxu0 0.0
  %233 = vmatpush.msra.mxu0 0.0
  %234 = vmatpush.msra.mxu0 0.0
  %235 = vmatpush.msra.mxu0 0.0
  %236 = vmatpush.msra.mxu0 %v148
  %237 = vmatpush.msra.mxu0 %v147
  %238 = vmatpush.msra.mxu0 %v146
  %239 = vmatpush.msra.mxu0 %v145
  %240 = vmatmul.f32.gmra.mxu0 %v222
  %v241 = vpop.f32.mrf.mxu0
  %v242 = vadd.f32 0.0, %v241
  %243 = vdwg.mxu0
  %v244 = vadd.f32 %v125, %v242
  %v245 = vtanh.pop %v244
  %v246 = vxor.u32 %v244, 2147483648
  %v247 = vmul.f32 %v246, 1.442695
  %v248 = vpow.pop %v247
  %v249 = vadd.f32 %v248, 1.0
  %v250 = vrcp.pop %v249
  %v251 = vmul.f32 %v249, %v250
  %v252 = vsub.f32 1.0, %v251
  %v253 = vmul.f32 %v250, %v252
  %v254 = vadd.f32 %v250, %v253
  %vm255 = vweird.f32 %v249
  %vm256 = vweird.f32 %v250
  %vm257 = vmor %vm255, %vm256
  %v258 = vsel %vm257, %v250, %v254
  %v259 = vand.u32 2147483647, %v249
  %vm260 = vcmp.eq.f32.partialorder %v259, 8.507059e+37
  %v261 = vand.u32 %v249, 2147483648
  %v262 = vor.u32 1.1754944e-38, %v261
  %v263 = vsel %vm260, %v262, %v258
  %v264 = vmul.f32 1.0, %v263
  %v265 = vsel %vm153, %v245, %v264
  %v266 = vmul.f32 %v265, %v210
  %268 = vrot.lane.b32.xlu0 %v265, 64
  %v269 = vpop.permute.xlu0 %268
  %v271 = vmul.f32 %v265, %v269
  %273 = vrot.lane.b32.xlu0 %v271, 32
  %v274 = vpop.permute.xlu0 %273
  %v276 = vadd.f32 %v266, %v274
  %v277 = vtanh.pop %v276
  %279 = vrot.lane.b32.xlu0 %v277, 64
  %v280 = vpop.permute.xlu0 %279
  %v282 = vmul.f32 %v265, %v280
  %284 = vrot.lane.b32.xlu0 %v282, 32
  %v285 = vpop.permute.xlu0 %284
  %287 = vst.msk [vmem:[#allocation2 + $0x8] sm:$0xff] %vm154, %v285
  %v288 = vsel %vm154, %v285, 0
  %290 = vmatpush.msra.mxu0 0.0
  %291 = vmatpush.msra.mxu0 0.0
  %292 = vmatpush.msra.mxu0 0.0
  %293 = vmatpush.msra.mxu0 0.0
  %294 = vmatpush.msra.mxu0 0.0
  %295 = vmatpush.msra.mxu0 0.0
  %296 = vmatpush.msra.mxu0 0.0
  %297 = vmatpush.msra.mxu0 0.0
  %298 = vmatpush.msra.mxu0 0.0
  %299 = vmatpush.msra.mxu0 0.0
  %300 = vmatpush.msra.mxu0 0.0
  %301 = vmatpush.msra.mxu0 0.0
  %302 = vmatpush.msra.mxu0 %v148
  %303 = vmatpush.msra.mxu0 %v147
  %304 = vmatpush.msra.mxu0 %v146
  %305 = vmatpush.msra.mxu0 %v145
  %306 = vmatmul.f32.gmra.mxu0 %v288
  %v307 = vpop.f32.mrf.mxu0
  %v308 = vadd.f32 0.0, %v307
  %309 = vdwg.mxu0
  %v310 = vadd.f32 %v128, %v308
  %v311 = vtanh.pop %v310
  %v312 = vxor.u32 %v310, 2147483648
  %v313 = vmul.f32 %v312, 1.442695
  %v314 = vpow.pop %v313
  %v315 = vadd.f32 %v314, 1.0
  %v316 = vrcp.pop %v315
  %v317 = vmul.f32 %v315, %v316
  %v318 = vsub.f32 1.0, %v317
  %v319 = vmul.f32 %v316, %v318
  %v320 = vadd.f32 %v316, %v319
  %vm321 = vweird.f32 %v315
  %vm322 = vweird.f32 %v316
  %vm323 = vmor %vm321, %vm322
  %v324 = vsel %vm323, %v316, %v320
  %v325 = vand.u32 2147483647, %v315
  %vm326 = vcmp.eq.f32.partialorder %v325, 8.507059e+37
  %v327 = vand.u32 %v315, 2147483648
  %v328 = vor.u32 1.1754944e-38, %v327
  %v329 = vsel %vm326, %v328, %v324
  %v330 = vmul.f32 1.0, %v329
  %v331 = vsel %vm153, %v311, %v330
  %v332 = vmul.f32 %v331, %v276
  %334 = vrot.lane.b32.xlu0 %v331, 64
  %v335 = vpop.permute.xlu0 %334
  %v337 = vmul.f32 %v331, %v335
  %339 = vrot.lane.b32.xlu0 %v337, 32
  %v340 = vpop.permute.xlu0 %339
  %v342 = vadd.f32 %v332, %v340
  %v343 = vtanh.pop %v342
  %345 = vrot.lane.b32.xlu0 %v343, 64
  %v346 = vpop.permute.xlu0 %345
  %v348 = vmul.f32 %v331, %v346
  %350 = vrot.lane.b32.xlu0 %v348, 32
  %v351 = vpop.permute.xlu0 %350
  %353 = vst.msk [vmem:[#allocation2 + $0x10] sm:$0xff] %vm154, %v351
  %v354 = vsel %vm154, %v351, 0
  %356 = vmatpush.msra.mxu0 0.0
  %357 = vmatpush.msra.mxu0 0.0
  %358 = vmatpush.msra.mxu0 0.0
  %359 = vmatpush.msra.mxu0 0.0
  %360 = vmatpush.msra.mxu0 0.0
  %361 = vmatpush.msra.mxu0 0.0
  %362 = vmatpush.msra.mxu0 0.0
  %363 = vmatpush.msra.mxu0 0.0
  %364 = vmatpush.msra.mxu0 0.0
  %365 = vmatpush.msra.mxu0 0.0
  %366 = vmatpush.msra.mxu0 0.0
  %367 = vmatpush.msra.mxu0 0.0
  %368 = vmatpush.msra.mxu0 %v148
  %369 = vmatpush.msra.mxu0 %v147
  %370 = vmatpush.msra.mxu0 %v146
  %371 = vmatpush.msra.mxu0 %v145
  %372 = vmatmul.f32.gmra.mxu0 %v354
  %v373 = vpop.f32.mrf.mxu0
  %v374 = vadd.f32 0.0, %v373
  %375 = vdwg.mxu0
  %v376 = vadd.f32 %v131, %v374
  %v377 = vtanh.pop %v376
  %v378 = vxor.u32 %v376, 2147483648
  %v379 = vmul.f32 %v378, 1.442695
  %v380 = vpow.pop %v379
  %v381 = vadd.f32 %v380, 1.0
  %v382 = vrcp.pop %v381
  %v383 = vmul.f32 %v381, %v382
  %v384 = vsub.f32 1.0, %v383
  %v385 = vmul.f32 %v382, %v384
  %v386 = vadd.f32 %v382, %v385
  %vm387 = vweird.f32 %v381
  %vm388 = vweird.f32 %v382
  %vm389 = vmor %vm387, %vm388
  %v390 = vsel %vm389, %v382, %v386
  %v391 = vand.u32 2147483647, %v381
  %vm392 = vcmp.eq.f32.partialorder %v391, 8.507059e+37
  %v393 = vand.u32 %v381, 2147483648
  %v394 = vor.u32 1.1754944e-38, %v393
  %v395 = vsel %vm392, %v394, %v390
  %v396 = vmul.f32 1.0, %v395
  %v397 = vsel %vm153, %v377, %v396
  %v398 = vmul.f32 %v397, %v342
  %400 = vrot.lane.b32.xlu0 %v397, 64
  %v401 = vpop.permute.xlu0 %400
  %v403 = vmul.f32 %v397, %v401
  %405 = vrot.lane.b32.xlu0 %v403, 32
  %v406 = vpop.permute.xlu0 %405
  %v408 = vadd.f32 %v398, %v406
  %v409 = vtanh.pop %v408
  %411 = vrot.lane.b32.xlu0 %v409, 64
  %v412 = vpop.permute.xlu0 %411
  %v414 = vmul.f32 %v397, %v412
  %416 = vrot.lane.b32.xlu0 %v414, 32
  %v417 = vpop.permute.xlu0 %416
  %419 = vst.msk [vmem:[#allocation2 + $0x18] sm:$0xff] %vm154, %v417
  %v420 = vsel %vm154, %v417, 0
  %422 = vmatpush.msra.mxu0 0.0
  %423 = vmatpush.msra.mxu0 0.0
  %424 = vmatpush.msra.mxu0 0.0
  %425 = vmatpush.msra.mxu0 0.0
  %426 = vmatpush.msra.mxu0 0.0
  %427 = vmatpush.msra.mxu0 0.0
  %428 = vmatpush.msra.mxu0 0.0
  %429 = vmatpush.msra.mxu0 0.0
  %430 = vmatpush.msra.mxu0 0.0
  %431 = vmatpush.msra.mxu0 0.0
  %432 = vmatpush.msra.mxu0 0.0
  %433 = vmatpush.msra.mxu0 0.0
  %434 = vmatpush.msra.mxu0 %v148
  %435 = vmatpush.msra.mxu0 %v147
  %436 = vmatpush.msra.mxu0 %v146
  %437 = vmatpush.msra.mxu0 %v145
  %438 = vmatmul.f32.gmra.mxu0 %v420
  %v439 = vpop.f32.mrf.mxu0
  %v440 = vadd.f32 0.0, %v439
  %441 = vdwg.mxu0
  %v442 = vadd.f32 %v134, %v440
  %v443 = vtanh.pop %v442
  %v444 = vxor.u32 %v442, 2147483648
  %v445 = vmul.f32 %v444, 1.442695
  %v446 = vpow.pop %v445
  %v447 = vadd.f32 %v446, 1.0
  %v448 = vrcp.pop %v447
  %v449 = vmul.f32 %v447, %v448
  %v450 = vsub.f32 1.0, %v449
  %v451 = vmul.f32 %v448, %v450
  %v452 = vadd.f32 %v448, %v451
  %vm453 = vweird.f32 %v447
  %vm454 = vweird.f32 %v448
  %vm455 = vmor %vm453, %vm454
  %v456 = vsel %vm455, %v448, %v452
  %v457 = vand.u32 2147483647, %v447
  %vm458 = vcmp.eq.f32.partialorder %v457, 8.507059e+37
  %v459 = vand.u32 %v447, 2147483648
  %v460 = vor.u32 1.1754944e-38, %v459
  %v461 = vsel %vm458, %v460, %v456
  %v462 = vmul.f32 1.0, %v461
  %v463 = vsel %vm153, %v443, %v462
  %v464 = vmul.f32 %v463, %v408
  %466 = vrot.lane.b32.xlu0 %v463, 64
  %v467 = vpop.permute.xlu0 %466
  %v469 = vmul.f32 %v463, %v467
  %471 = vrot.lane.b32.xlu0 %v469, 32
  %v472 = vpop.permute.xlu0 %471
  %v474 = vadd.f32 %v464, %v472
  %v475 = vtanh.pop %v474
  %477 = vrot.lane.b32.xlu0 %v475, 64
  %v478 = vpop.permute.xlu0 %477
  %v480 = vmul.f32 %v463, %v478
  %482 = vrot.lane.b32.xlu0 %v480, 32
  %v483 = vpop.permute.xlu0 %482
  %485 = vst.msk [vmem:[#allocation2 + $0x20] sm:$0xff] %vm154, %v483
  %v486 = vsel %vm154, %v483, 0
  %488 = vmatpush.msra.mxu0 0.0
  %489 = vmatpush.msra.mxu0 0.0
  %490 = vmatpush.msra.mxu0 0.0
  %491 = vmatpush.msra.mxu0 0.0
  %492 = vmatpush.msra.mxu0 0.0
  %493 = vmatpush.msra.mxu0 0.0
  %494 = vmatpush.msra.mxu0 0.0
  %495 = vmatpush.msra.mxu0 0.0
  %496 = vmatpush.msra.mxu0 0.0
  %497 = vmatpush.msra.mxu0 0.0
  %498 = vmatpush.msra.mxu0 0.0
  %499 = vmatpush.msra.mxu0 0.0
  %500 = vmatpush.msra.mxu0 %v148
  %501 = vmatpush.msra.mxu0 %v147
  %502 = vmatpush.msra.mxu0 %v146
  %503 = vmatpush.msra.mxu0 %v145
  %504 = vmatmul.f32.gmra.mxu0 %v486
  %v505 = vpop.f32.mrf.mxu0
  %v506 = vadd.f32 0.0, %v505
  %507 = vdwg.mxu0
  %v508 = vadd.f32 %v137, %v506
  %v509 = vtanh.pop %v508
  %v510 = vxor.u32 %v508, 2147483648
  %v511 = vmul.f32 %v510, 1.442695
  %v512 = vpow.pop %v511
  %v513 = vadd.f32 %v512, 1.0
  %v514 = vrcp.pop %v513
  %v515 = vmul.f32 %v513, %v514
  %v516 = vsub.f32 1.0, %v515
  %v517 = vmul.f32 %v514, %v516
  %v518 = vadd.f32 %v514, %v517
  %vm519 = vweird.f32 %v513
  %vm520 = vweird.f32 %v514
  %vm521 = vmor %vm519, %vm520
  %v522 = vsel %vm521, %v514, %v518
  %v523 = vand.u32 2147483647, %v513
  %vm524 = vcmp.eq.f32.partialorder %v523, 8.507059e+37
  %v525 = vand.u32 %v513, 2147483648
  %v526 = vor.u32 1.1754944e-38, %v525
  %v527 = vsel %vm524, %v526, %v522
  %v528 = vmul.f32 1.0, %v527
  %v529 = vsel %vm153, %v509, %v528
  %v530 = vmul.f32 %v529, %v474
  %532 = vrot.lane.b32.xlu0 %v529, 64
  %v533 = vpop.permute.xlu0 %532
  %v535 = vmul.f32 %v529, %v533
  %537 = vrot.lane.b32.xlu0 %v535, 32
  %v538 = vpop.permute.xlu0 %537
  %v540 = vadd.f32 %v530, %v538
  %v541 = vtanh.pop %v540
  %543 = vrot.lane.b32.xlu0 %v541, 64
  %v544 = vpop.permute.xlu0 %543
  %v546 = vmul.f32 %v529, %v544
  %548 = vrot.lane.b32.xlu0 %v546, 32
  %v549 = vpop.permute.xlu0 %548
  %551 = vst.msk [vmem:[#allocation2 + $0x28] sm:$0xff] %vm154, %v549
  %v552 = vsel %vm154, %v549, 0
  %554 = vmatpush.msra.mxu0 0.0
  %555 = vmatpush.msra.mxu0 0.0
  %556 = vmatpush.msra.mxu0 0.0
  %557 = vmatpush.msra.mxu0 0.0
  %558 = vmatpush.msra.mxu0 0.0
  %559 = vmatpush.msra.mxu0 0.0
  %560 = vmatpush.msra.mxu0 0.0
  %561 = vmatpush.msra.mxu0 0.0
  %562 = vmatpush.msra.mxu0 0.0
  %563 = vmatpush.msra.mxu0 0.0
  %564 = vmatpush.msra.mxu0 0.0
  %565 = vmatpush.msra.mxu0 0.0
  %566 = vmatpush.msra.mxu0 %v148
  %567 = vmatpush.msra.mxu0 %v147
  %568 = vmatpush.msra.mxu0 %v146
  %569 = vmatpush.msra.mxu0 %v145
  %570 = vmatmul.f32.gmra.mxu0 %v552
  %v571 = vpop.f32.mrf.mxu0
  %v572 = vadd.f32 0.0, %v571
  %573 = vdwg.mxu0
  %v574 = vadd.f32 %v140, %v572
  %v575 = vtanh.pop %v574
  %v576 = vxor.u32 %v574, 2147483648
  %v577 = vmul.f32 %v576, 1.442695
  %v578 = vpow.pop %v577
  %v579 = vadd.f32 %v578, 1.0
  %v580 = vrcp.pop %v579
  %v581 = vmul.f32 %v579, %v580
  %v582 = vsub.f32 1.0, %v581
  %v583 = vmul.f32 %v580, %v582
  %v584 = vadd.f32 %v580, %v583
  %vm585 = vweird.f32 %v579
  %vm586 = vweird.f32 %v580
  %vm587 = vmor %vm585, %vm586
  %v588 = vsel %vm587, %v580, %v584
  %v589 = vand.u32 2147483647, %v579
  %vm590 = vcmp.eq.f32.partialorder %v589, 8.507059e+37
  %v591 = vand.u32 %v579, 2147483648
  %v592 = vor.u32 1.1754944e-38, %v591
  %v593 = vsel %vm590, %v592, %v588
  %v594 = vmul.f32 1.0, %v593
  %v595 = vsel %vm153, %v575, %v594
  %v596 = vmul.f32 %v595, %v540
  %598 = vrot.lane.b32.xlu0 %v595, 64
  %v599 = vpop.permute.xlu0 %598
  %v601 = vmul.f32 %v595, %v599
  %603 = vrot.lane.b32.xlu0 %v601, 32
  %v604 = vpop.permute.xlu0 %603
  %v606 = vadd.f32 %v596, %v604
  %v607 = vtanh.pop %v606
  %609 = vrot.lane.b32.xlu0 %v607, 64
  %v610 = vpop.permute.xlu0 %609
  %v612 = vmul.f32 %v595, %v610
  %614 = vrot.lane.b32.xlu0 %v612, 32
  %v615 = vpop.permute.xlu0 %614
  %617 = vst.msk [vmem:[#allocation2 + $0x30] sm:$0xff] %vm154, %v615
  %v618 = vsel %vm154, %v615, 0
  %620 = vmatpush.msra.mxu0 0.0
  %621 = vmatpush.msra.mxu0 0.0
  %622 = vmatpush.msra.mxu0 0.0
  %623 = vmatpush.msra.mxu0 0.0
  %624 = vmatpush.msra.mxu0 0.0
  %625 = vmatpush.msra.mxu0 0.0
  %626 = vmatpush.msra.mxu0 0.0
  %627 = vmatpush.msra.mxu0 0.0
  %628 = vmatpush.msra.mxu0 0.0
  %629 = vmatpush.msra.mxu0 0.0
  %630 = vmatpush.msra.mxu0 0.0
  %631 = vmatpush.msra.mxu0 0.0
  %632 = vmatpush.msra.mxu0 %v148
  %633 = vmatpush.msra.mxu0 %v147
  %634 = vmatpush.msra.mxu0 %v146
  %635 = vmatpush.msra.mxu0 %v145
  %636 = vmatmul.f32.gmra.mxu0 %v618
  %v637 = vpop.f32.mrf.mxu0
  %v638 = vadd.f32 0.0, %v637
  %639 = vdwg.mxu0
  %v640 = vadd.f32 %v143, %v638
  %v641 = vtanh.pop %v640
  %v642 = vxor.u32 %v640, 2147483648
  %v643 = vmul.f32 %v642, 1.442695
  %v644 = vpow.pop %v643
  %v645 = vadd.f32 %v644, 1.0
  %v646 = vrcp.pop %v645
  %v647 = vmul.f32 %v645, %v646
  %v648 = vsub.f32 1.0, %v647
  %v649 = vmul.f32 %v646, %v648
  %v650 = vadd.f32 %v646, %v649
  %vm651 = vweird.f32 %v645
  %vm652 = vweird.f32 %v646
  %vm653 = vmor %vm651, %vm652
  %v654 = vsel %vm653, %v646, %v650
  %v655 = vand.u32 2147483647, %v645
  %vm656 = vcmp.eq.f32.partialorder %v655, 8.507059e+37
  %v657 = vand.u32 %v645, 2147483648
  %v658 = vor.u32 1.1754944e-38, %v657
  %v659 = vsel %vm656, %v658, %v654
  %v660 = vmul.f32 1.0, %v659
  %v661 = vsel %vm153, %v641, %v660
  %v662 = vmul.f32 %v661, %v606
  %664 = vrot.lane.b32.xlu0 %v661, 64
  %v665 = vpop.permute.xlu0 %664
  %v667 = vmul.f32 %v661, %v665
  %669 = vrot.lane.b32.xlu0 %v667, 32
  %v670 = vpop.permute.xlu0 %669
  %v672 = vadd.f32 %v662, %v670
  %v673 = vtanh.pop %v672
  %675 = vrot.lane.b32.xlu0 %v673, 64
  %v676 = vpop.permute.xlu0 %675
  %v678 = vmul.f32 %v661, %v676
  %680 = vrot.lane.b32.xlu0 %v678, 32
  %v681 = vpop.permute.xlu0 %680
  %683 = vst.msk [vmem:[#allocation2 + $0x38] sm:$0xff] %vm154, %v681
  %v684 = vld [vmem:[#allocation2] sm:$0xff]
  %v685 = vld [vmem:[#allocation2 + $0x8] sm:$0xff]
  %v686 = vld [vmem:[#allocation2 + $0x10] sm:$0xff]
  %v687 = vld [vmem:[#allocation2 + $0x18] sm:$0xff]
  %v688 = vld [vmem:[#allocation2 + $0x20] sm:$0xff]
  %v689 = vld [vmem:[#allocation2 + $0x28] sm:$0xff]
  %v690 = vld [vmem:[#allocation2 + $0x30] sm:$0xff]
  %v691 = vld [vmem:[#allocation2 + $0x38] sm:$0xff]
  %v692 = vld [vmem:[%s4] sm:$0xff]
  %v693 = vld [vmem:[%s4 + $0x8] sm:$0xff]
  %v694 = vld [vmem:[%s4 + $0x10] sm:$0xff]
  %v695 = vld [vmem:[%s4 + $0x18] sm:$0xff]
  %v696 = vld [vmem:[%s6] sm:$0x1]
  %v698 = vperm.slane %v696, 0
  %v701 = vsel %vm154, %v684, 0
  %v704 = vsel %vm154, %v685, 0
  %v707 = vsel %vm154, %v686, 0
  %v710 = vsel %vm154, %v687, 0
  %v713 = vsel %vm154, %v688, 0
  %v716 = vsel %vm154, %v689, 0
  %v719 = vsel %vm154, %v690, 0
  %v722 = vsel %vm154, %v691, 0
  %724 = vmatpush.msra.mxu0 0.0
  %725 = vmatpush.msra.mxu0 0.0
  %726 = vmatpush.msra.mxu0 0.0
  %727 = vmatpush.msra.mxu0 0.0
  %728 = vmatpush.msra.mxu0 0.0
  %729 = vmatpush.msra.mxu0 0.0
  %730 = vmatpush.msra.mxu0 0.0
  %731 = vmatpush.msra.mxu0 0.0
  %732 = vmatpush.msra.mxu0 0.0
  %733 = vmatpush.msra.mxu0 0.0
  %734 = vmatpush.msra.mxu0 0.0
  %735 = vmatpush.msra.mxu0 0.0
  %736 = vmatpush.msra.mxu0 %v695
  %737 = vmatpush.msra.mxu0 %v694
  %738 = vmatpush.msra.mxu0 %v693
  %739 = vmatpush.msra.mxu0 %v692
  %740 = vmatmul.f32.gmra.mxu0 %v701
  %v741 = vpop.f32.mrf.mxu0
  %v742 = vadd.f32 %v698, %v741
  %743 = vmatmul.f32.gmra.mxu0 %v704
  %v744 = vpop.f32.mrf.mxu0
  %v745 = vadd.f32 %v698, %v744
  %746 = vmatmul.f32.gmra.mxu0 %v707
  %v747 = vpop.f32.mrf.mxu0
  %v748 = vadd.f32 %v698, %v747
  %749 = vmatmul.f32.gmra.mxu0 %v710
  %v750 = vpop.f32.mrf.mxu0
  %v751 = vadd.f32 %v698, %v750
  %752 = vmatmul.f32.gmra.mxu0 %v713
  %v753 = vpop.f32.mrf.mxu0
  %v754 = vadd.f32 %v698, %v753
  %755 = vmatmul.f32.gmra.mxu0 %v716
  %v756 = vpop.f32.mrf.mxu0
  %v757 = vadd.f32 %v698, %v756
  %758 = vmatmul.f32.gmra.mxu0 %v719
  %v759 = vpop.f32.mrf.mxu0
  %v760 = vadd.f32 %v698, %v759
  %761 = vmatmul.f32.gmra.mxu0 %v722
  %v762 = vpop.f32.mrf.mxu0
  %v763 = vadd.f32 %v698, %v762
  %764 = vdwg.mxu0
  %v765 = vld [vmem:[%s5] sm:$0xff]
  %v766 = vld [vmem:[%s5 + $0x8] sm:$0xff]
  %v767 = vld [vmem:[%s5 + $0x10] sm:$0xff]
  %v768 = vld [vmem:[%s5 + $0x18] sm:$0xff]
  %769 = vmatpush.msra.mxu0 0.0
  %770 = vmatpush.msra.mxu0 0.0
  %771 = vmatpush.msra.mxu0 0.0
  %772 = vmatpush.msra.mxu0 0.0
  %773 = vmatpush.msra.mxu0 0.0
  %774 = vmatpush.msra.mxu0 0.0
  %775 = vmatpush.msra.mxu0 0.0
  %776 = vmatpush.msra.mxu0 0.0
  %777 = vmatpush.msra.mxu0 0.0
  %778 = vmatpush.msra.mxu0 0.0
  %779 = vmatpush.msra.mxu0 0.0
  %780 = vmatpush.msra.mxu0 0.0
  %781 = vmatpush.msra.mxu0 %v768
  %782 = vmatpush.msra.mxu0 %v767
  %783 = vmatpush.msra.mxu0 %v766
  %784 = vmatpush.msra.mxu0 %v765
  %785 = vmatmul.f32.gmra.mxu0 %v156
  %v786 = vpop.f32.mrf.mxu0
  %v787 = vadd.f32 0.0, %v786
  %788 = vdwg.mxu0
  %v789 = vadd.f32 %v742, %v787
  %v790 = vtanh.pop %v789
  %v791 = vxor.u32 %v789, 2147483648
  %v792 = vmul.f32 %v791, 1.442695
  %v793 = vpow.pop %v792
  %v794 = vadd.f32 %v793, 1.0
  %v795 = vrcp.pop %v794
  %v796 = vmul.f32 %v794, %v795
  %v797 = vsub.f32 1.0, %v796
  %v798 = vmul.f32 %v795, %v797
  %v799 = vadd.f32 %v795, %v798
  %vm800 = vweird.f32 %v794
  %vm801 = vweird.f32 %v795
  %vm802 = vmor %vm800, %vm801
  %v803 = vsel %vm802, %v795, %v799
  %v804 = vand.u32 2147483647, %v794
  %vm805 = vcmp.eq.f32.partialorder %v804, 8.507059e+37
  %v806 = vand.u32 %v794, 2147483648
  %v807 = vor.u32 1.1754944e-38, %v806
  %v808 = vsel %vm805, %v807, %v803
  %v809 = vmul.f32 1.0, %v808
  %v810 = vsel %vm153, %v790, %v809
  %v811 = vmul.f32 %v810, 0.0
  %813 = vrot.lane.b32.xlu0 %v810, 64
  %v814 = vpop.permute.xlu0 %813
  %v816 = vmul.f32 %v810, %v814
  %818 = vrot.lane.b32.xlu0 %v816, 32
  %v819 = vpop.permute.xlu0 %818
  %v821 = vadd.f32 %v811, %v819
  %v822 = vtanh.pop %v821
  %824 = vrot.lane.b32.xlu0 %v822, 64
  %v825 = vpop.permute.xlu0 %824
  %v827 = vmul.f32 %v810, %v825
  %829 = vrot.lane.b32.xlu0 %v827, 32
  %v830 = vpop.permute.xlu0 %829
  %832 = vst.msk [vmem:[#allocation2] sm:$0xff] %vm154, %v830
  %v833 = vsel %vm154, %v830, 0
  %835 = vmatpush.msra.mxu0 0.0
  %836 = vmatpush.msra.mxu0 0.0
  %837 = vmatpush.msra.mxu0 0.0
  %838 = vmatpush.msra.mxu0 0.0
  %839 = vmatpush.msra.mxu0 0.0
  %840 = vmatpush.msra.mxu0 0.0
  %841 = vmatpush.msra.mxu0 0.0
  %842 = vmatpush.msra.mxu0 0.0
  %843 = vmatpush.msra.mxu0 0.0
  %844 = vmatpush.msra.mxu0 0.0
  %845 = vmatpush.msra.mxu0 0.0
  %846 = vmatpush.msra.mxu0 0.0
  %847 = vmatpush.msra.mxu0 %v768
  %848 = vmatpush.msra.mxu0 %v767
  %849 = vmatpush.msra.mxu0 %v766
  %850 = vmatpush.msra.mxu0 %v765
  %851 = vmatmul.f32.gmra.mxu0 %v833
  %v852 = vpop.f32.mrf.mxu0
  %v853 = vadd.f32 0.0, %v852
  %854 = vdwg.mxu0
  %v855 = vadd.f32 %v745, %v853
  %v856 = vtanh.pop %v855
  %v857 = vxor.u32 %v855, 2147483648
  %v858 = vmul.f32 %v857, 1.442695
  %v859 = vpow.pop %v858
  %v860 = vadd.f32 %v859, 1.0
  %v861 = vrcp.pop %v860
  %v862 = vmul.f32 %v860, %v861
  %v863 = vsub.f32 1.0, %v862
  %v864 = vmul.f32 %v861, %v863
  %v865 = vadd.f32 %v861, %v864
  %vm866 = vweird.f32 %v860
  %vm867 = vweird.f32 %v861
  %vm868 = vmor %vm866, %vm867
  %v869 = vsel %vm868, %v861, %v865
  %v870 = vand.u32 2147483647, %v860
  %vm871 = vcmp.eq.f32.partialorder %v870, 8.507059e+37
  %v872 = vand.u32 %v860, 2147483648
  %v873 = vor.u32 1.1754944e-38, %v872
  %v874 = vsel %vm871, %v873, %v869
  %v875 = vmul.f32 1.0, %v874
  %v876 = vsel %vm153, %v856, %v875
  %v877 = vmul.f32 %v876, %v821
  %879 = vrot.lane.b32.xlu0 %v876, 64
  %v880 = vpop.permute.xlu0 %879
  %v882 = vmul.f32 %v876, %v880
  %884 = vrot.lane.b32.xlu0 %v882, 32
  %v885 = vpop.permute.xlu0 %884
  %v887 = vadd.f32 %v877, %v885
  %v888 = vtanh.pop %v887
  %890 = vrot.lane.b32.xlu0 %v888, 64
  %v891 = vpop.permute.xlu0 %890
  %v893 = vmul.f32 %v876, %v891
  %895 = vrot.lane.b32.xlu0 %v893, 32
  %v896 = vpop.permute.xlu0 %895
  %898 = vst.msk [vmem:[#allocation2 + $0x8] sm:$0xff] %vm154, %v896
  %v899 = vsel %vm154, %v896, 0
  %901 = vmatpush.msra.mxu0 0.0
  %902 = vmatpush.msra.mxu0 0.0
  %903 = vmatpush.msra.mxu0 0.0
  %904 = vmatpush.msra.mxu0 0.0
  %905 = vmatpush.msra.mxu0 0.0
  %906 = vmatpush.msra.mxu0 0.0
  %907 = vmatpush.msra.mxu0 0.0
  %908 = vmatpush.msra.mxu0 0.0
  %909 = vmatpush.msra.mxu0 0.0
  %910 = vmatpush.msra.mxu0 0.0
  %911 = vmatpush.msra.mxu0 0.0
  %912 = vmatpush.msra.mxu0 0.0
  %913 = vmatpush.msra.mxu0 %v768
  %914 = vmatpush.msra.mxu0 %v767
  %915 = vmatpush.msra.mxu0 %v766
  %916 = vmatpush.msra.mxu0 %v765
  %917 = vmatmul.f32.gmra.mxu0 %v899
  %v918 = vpop.f32.mrf.mxu0
  %v919 = vadd.f32 0.0, %v918
  %920 = vdwg.mxu0
  %v921 = vadd.f32 %v748, %v919
  %v922 = vtanh.pop %v921
  %v923 = vxor.u32 %v921, 2147483648
  %v924 = vmul.f32 %v923, 1.442695
  %v925 = vpow.pop %v924
  %v926 = vadd.f32 %v925, 1.0
  %v927 = vrcp.pop %v926
  %v928 = vmul.f32 %v926, %v927
  %v929 = vsub.f32 1.0, %v928
  %v930 = vmul.f32 %v927, %v929
  %v931 = vadd.f32 %v927, %v930
  %vm932 = vweird.f32 %v926
  %vm933 = vweird.f32 %v927
  %vm934 = vmor %vm932, %vm933
  %v935 = vsel %vm934, %v927, %v931
  %v936 = vand.u32 2147483647, %v926
  %vm937 = vcmp.eq.f32.partialorder %v936, 8.507059e+37
  %v938 = vand.u32 %v926, 2147483648
  %v939 = vor.u32 1.1754944e-38, %v938
  %v940 = vsel %vm937, %v939, %v935
  %v941 = vmul.f32 1.0, %v940
  %v942 = vsel %vm153, %v922, %v941
  %v943 = vmul.f32 %v942, %v887
  %945 = vrot.lane.b32.xlu0 %v942, 64
  %v946 = vpop.permute.xlu0 %945
  %v948 = vmul.f32 %v942, %v946
  %950 = vrot.lane.b32.xlu0 %v948, 32
  %v951 = vpop.permute.xlu0 %950
  %v953 = vadd.f32 %v943, %v951
  %v954 = vtanh.pop %v953
  %956 = vrot.lane.b32.xlu0 %v954, 64
  %v957 = vpop.permute.xlu0 %956
  %v959 = vmul.f32 %v942, %v957
  %961 = vrot.lane.b32.xlu0 %v959, 32
  %v962 = vpop.permute.xlu0 %961
  %964 = vst.msk [vmem:[#allocation2 + $0x10] sm:$0xff] %vm154, %v962
  %v965 = vsel %vm154, %v962, 0
  %967 = vmatpush.msra.mxu0 0.0
  %968 = vmatpush.msra.mxu0 0.0
  %969 = vmatpush.msra.mxu0 0.0
  %970 = vmatpush.msra.mxu0 0.0
  %971 = vmatpush.msra.mxu0 0.0
  %972 = vmatpush.msra.mxu0 0.0
  %973 = vmatpush.msra.mxu0 0.0
  %974 = vmatpush.msra.mxu0 0.0
  %975 = vmatpush.msra.mxu0 0.0
  %976 = vmatpush.msra.mxu0 0.0
  %977 = vmatpush.msra.mxu0 0.0
  %978 = vmatpush.msra.mxu0 0.0
  %979 = vmatpush.msra.mxu0 %v768
  %980 = vmatpush.msra.mxu0 %v767
  %981 = vmatpush.msra.mxu0 %v766
  %982 = vmatpush.msra.mxu0 %v765
  %983 = vmatmul.f32.gmra.mxu0 %v965
  %v984 = vpop.f32.mrf.mxu0
  %v985 = vadd.f32 0.0, %v984
  %986 = vdwg.mxu0
  %v987 = vadd.f32 %v751, %v985
  %v988 = vtanh.pop %v987
  %v989 = vxor.u32 %v987, 2147483648
  %v990 = vmul.f32 %v989, 1.442695
  %v991 = vpow.pop %v990
  %v992 = vadd.f32 %v991, 1.0
  %v993 = vrcp.pop %v992
  %v994 = vmul.f32 %v992, %v993
  %v995 = vsub.f32 1.0, %v994
  %v996 = vmul.f32 %v993, %v995
  %v997 = vadd.f32 %v993, %v996
  %vm998 = vweird.f32 %v992
  %vm999 = vweird.f32 %v993
  %vm1000 = vmor %vm998, %vm999
  %v1001 = vsel %vm1000, %v993, %v997
  %v1002 = vand.u32 2147483647, %v992
  %vm1003 = vcmp.eq.f32.partialorder %v1002, 8.507059e+37
  %v1004 = vand.u32 %v992, 2147483648
  %v1005 = vor.u32 1.1754944e-38, %v1004
  %v1006 = vsel %vm1003, %v1005, %v1001
  %v1007 = vmul.f32 1.0, %v1006
  %v1008 = vsel %vm153, %v988, %v1007
  %v1009 = vmul.f32 %v1008, %v953
  %1011 = vrot.lane.b32.xlu0 %v1008, 64
  %v1012 = vpop.permute.xlu0 %1011
  %v1014 = vmul.f32 %v1008, %v1012
  %1016 = vrot.lane.b32.xlu0 %v1014, 32
  %v1017 = vpop.permute.xlu0 %1016
  %v1019 = vadd.f32 %v1009, %v1017
  %v1020 = vtanh.pop %v1019
  %1022 = vrot.lane.b32.xlu0 %v1020, 64
  %v1023 = vpop.permute.xlu0 %1022
  %v1025 = vmul.f32 %v1008, %v1023
  %1027 = vrot.lane.b32.xlu0 %v1025, 32
  %v1028 = vpop.permute.xlu0 %1027
  %1030 = vst.msk [vmem:[#allocation2 + $0x18] sm:$0xff] %vm154, %v1028
  %v1031 = vsel %vm154, %v1028, 0
  %1033 = vmatpush.msra.mxu0 0.0
  %1034 = vmatpush.msra.mxu0 0.0
  %1035 = vmatpush.msra.mxu0 0.0
  %1036 = vmatpush.msra.mxu0 0.0
  %1037 = vmatpush.msra.mxu0 0.0
  %1038 = vmatpush.msra.mxu0 0.0
  %1039 = vmatpush.msra.mxu0 0.0
  %1040 = vmatpush.msra.mxu0 0.0
  %1041 = vmatpush.msra.mxu0 0.0
  %1042 = vmatpush.msra.mxu0 0.0
  %1043 = vmatpush.msra.mxu0 0.0
  %1044 = vmatpush.msra.mxu0 0.0
  %1045 = vmatpush.msra.mxu0 %v768
  %1046 = vmatpush.msra.mxu0 %v767
  %1047 = vmatpush.msra.mxu0 %v766
  %1048 = vmatpush.msra.mxu0 %v765
  %1049 = vmatmul.f32.gmra.mxu0 %v1031
  %v1050 = vpop.f32.mrf.mxu0
  %v1051 = vadd.f32 0.0, %v1050
  %1052 = vdwg.mxu0
  %v1053 = vadd.f32 %v754, %v1051
  %v1054 = vtanh.pop %v1053
  %v1055 = vxor.u32 %v1053, 2147483648
  %v1056 = vmul.f32 %v1055, 1.442695
  %v1057 = vpow.pop %v1056
  %v1058 = vadd.f32 %v1057, 1.0
  %v1059 = vrcp.pop %v1058
  %v1060 = vmul.f32 %v1058, %v1059
  %v1061 = vsub.f32 1.0, %v1060
  %v1062 = vmul.f32 %v1059, %v1061
  %v1063 = vadd.f32 %v1059, %v1062
  %vm1064 = vweird.f32 %v1058
  %vm1065 = vweird.f32 %v1059
  %vm1066 = vmor %vm1064, %vm1065
  %v1067 = vsel %vm1066, %v1059, %v1063
  %v1068 = vand.u32 2147483647, %v1058
  %vm1069 = vcmp.eq.f32.partialorder %v1068, 8.507059e+37
  %v1070 = vand.u32 %v1058, 2147483648
  %v1071 = vor.u32 1.1754944e-38, %v1070
  %v1072 = vsel %vm1069, %v1071, %v1067
  %v1073 = vmul.f32 1.0, %v1072
  %v1074 = vsel %vm153, %v1054, %v1073
  %v1075 = vmul.f32 %v1074, %v1019
  %1077 = vrot.lane.b32.xlu0 %v1074, 64
  %v1078 = vpop.permute.xlu0 %1077
  %v1080 = vmul.f32 %v1074, %v1078
  %1082 = vrot.lane.b32.xlu0 %v1080, 32
  %v1083 = vpop.permute.xlu0 %1082
  %v1085 = vadd.f32 %v1075, %v1083
  %v1086 = vtanh.pop %v1085
  %1088 = vrot.lane.b32.xlu0 %v1086, 64
  %v1089 = vpop.permute.xlu0 %1088
  %v1091 = vmul.f32 %v1074, %v1089
  %1093 = vrot.lane.b32.xlu0 %v1091, 32
  %v1094 = vpop.permute.xlu0 %1093
  %1096 = vst.msk [vmem:[#allocation2 + $0x20] sm:$0xff] %vm154, %v1094
  %v1097 = vsel %vm154, %v1094, 0
  %1099 = vmatpush.msra.mxu0 0.0
  %1100 = vmatpush.msra.mxu0 0.0
  %1101 = vmatpush.msra.mxu0 0.0
  %1102 = vmatpush.msra.mxu0 0.0
  %1103 = vmatpush.msra.mxu0 0.0
  %1104 = vmatpush.msra.mxu0 0.0
  %1105 = vmatpush.msra.mxu0 0.0
  %1106 = vmatpush.msra.mxu0 0.0
  %1107 = vmatpush.msra.mxu0 0.0
  %1108 = vmatpush.msra.mxu0 0.0
  %1109 = vmatpush.msra.mxu0 0.0
  %1110 = vmatpush.msra.mxu0 0.0
  %1111 = vmatpush.msra.mxu0 %v768
  %1112 = vmatpush.msra.mxu0 %v767
  %1113 = vmatpush.msra.mxu0 %v766
  %1114 = vmatpush.msra.mxu0 %v765
  %1115 = vmatmul.f32.gmra.mxu0 %v1097
  %v1116 = vpop.f32.mrf.mxu0
  %v1117 = vadd.f32 0.0, %v1116
  %1118 = vdwg.mxu0
  %v1119 = vadd.f32 %v757, %v1117
  %v1120 = vtanh.pop %v1119
  %v1121 = vxor.u32 %v1119, 2147483648
  %v1122 = vmul.f32 %v1121, 1.442695
  %v1123 = vpow.pop %v1122
  %v1124 = vadd.f32 %v1123, 1.0
  %v1125 = vrcp.pop %v1124
  %v1126 = vmul.f32 %v1124, %v1125
  %v1127 = vsub.f32 1.0, %v1126
  %v1128 = vmul.f32 %v1125, %v1127
  %v1129 = vadd.f32 %v1125, %v1128
  %vm1130 = vweird.f32 %v1124
  %vm1131 = vweird.f32 %v1125
  %vm1132 = vmor %vm1130, %vm1131
  %v1133 = vsel %vm1132, %v1125, %v1129
  %v1134 = vand.u32 2147483647, %v1124
  %vm1135 = vcmp.eq.f32.partialorder %v1134, 8.507059e+37
  %v1136 = vand.u32 %v1124, 2147483648
  %v1137 = vor.u32 1.1754944e-38, %v1136
  %v1138 = vsel %vm1135, %v1137, %v1133
  %v1139 = vmul.f32 1.0, %v1138
  %v1140 = vsel %vm153, %v1120, %v1139
  %v1141 = vmul.f32 %v1140, %v1085
  %1143 = vrot.lane.b32.xlu0 %v1140, 64
  %v1144 = vpop.permute.xlu0 %1143
  %v1146 = vmul.f32 %v1140, %v1144
  %1148 = vrot.lane.b32.xlu0 %v1146, 32
  %v1149 = vpop.permute.xlu0 %1148
  %v1151 = vadd.f32 %v1141, %v1149
  %v1152 = vtanh.pop %v1151
  %1154 = vrot.lane.b32.xlu0 %v1152, 64
  %v1155 = vpop.permute.xlu0 %1154
  %v1157 = vmul.f32 %v1140, %v1155
  %1159 = vrot.lane.b32.xlu0 %v1157, 32
  %v1160 = vpop.permute.xlu0 %1159
  %1162 = vst.msk [vmem:[#allocation2 + $0x28] sm:$0xff] %vm154, %v1160
  %v1163 = vsel %vm154, %v1160, 0
  %1165 = vmatpush.msra.mxu0 0.0
  %1166 = vmatpush.msra.mxu0 0.0
  %1167 = vmatpush.msra.mxu0 0.0
  %1168 = vmatpush.msra.mxu0 0.0
  %1169 = vmatpush.msra.mxu0 0.0
  %1170 = vmatpush.msra.mxu0 0.0
  %1171 = vmatpush.msra.mxu0 0.0
  %1172 = vmatpush.msra.mxu0 0.0
  %1173 = vmatpush.msra.mxu0 0.0
  %1174 = vmatpush.msra.mxu0 0.0
  %1175 = vmatpush.msra.mxu0 0.0
  %1176 = vmatpush.msra.mxu0 0.0
  %1177 = vmatpush.msra.mxu0 %v768
  %1178 = vmatpush.msra.mxu0 %v767
  %1179 = vmatpush.msra.mxu0 %v766
  %1180 = vmatpush.msra.mxu0 %v765
  %1181 = vmatmul.f32.gmra.mxu0 %v1163
  %v1182 = vpop.f32.mrf.mxu0
  %v1183 = vadd.f32 0.0, %v1182
  %1184 = vdwg.mxu0
  %v1185 = vadd.f32 %v760, %v1183
  %v1186 = vtanh.pop %v1185
  %v1187 = vxor.u32 %v1185, 2147483648
  %v1188 = vmul.f32 %v1187, 1.442695
  %v1189 = vpow.pop %v1188
  %v1190 = vadd.f32 %v1189, 1.0
  %v1191 = vrcp.pop %v1190
  %v1192 = vmul.f32 %v1190, %v1191
  %v1193 = vsub.f32 1.0, %v1192
  %v1194 = vmul.f32 %v1191, %v1193
  %v1195 = vadd.f32 %v1191, %v1194
  %vm1196 = vweird.f32 %v1190
  %vm1197 = vweird.f32 %v1191
  %vm1198 = vmor %vm1196, %vm1197
  %v1199 = vsel %vm1198, %v1191, %v1195
  %v1200 = vand.u32 2147483647, %v1190
  %vm1201 = vcmp.eq.f32.partialorder %v1200, 8.507059e+37
  %v1202 = vand.u32 %v1190, 2147483648
  %v1203 = vor.u32 1.1754944e-38, %v1202
  %v1204 = vsel %vm1201, %v1203, %v1199
  %v1205 = vmul.f32 1.0, %v1204
  %v1206 = vsel %vm153, %v1186, %v1205
  %v1207 = vmul.f32 %v1206, %v1151
  %1209 = vrot.lane.b32.xlu0 %v1206, 64
  %v1210 = vpop.permute.xlu0 %1209
  %v1212 = vmul.f32 %v1206, %v1210
  %1214 = vrot.lane.b32.xlu0 %v1212, 32
  %v1215 = vpop.permute.xlu0 %1214
  %v1217 = vadd.f32 %v1207, %v1215
  %v1218 = vtanh.pop %v1217
  %1220 = vrot.lane.b32.xlu0 %v1218, 64
  %v1221 = vpop.permute.xlu0 %1220
  %v1223 = vmul.f32 %v1206, %v1221
  %1225 = vrot.lane.b32.xlu0 %v1223, 32
  %v1226 = vpop.permute.xlu0 %1225
  %1228 = vst.msk [vmem:[#allocation2 + $0x30] sm:$0xff] %vm154, %v1226
  %v1229 = vsel %vm154, %v1226, 0
  %1231 = vmatpush.msra.mxu0 0.0
  %1232 = vmatpush.msra.mxu0 0.0
  %1233 = vmatpush.msra.mxu0 0.0
  %1234 = vmatpush.msra.mxu0 0.0
  %1235 = vmatpush.msra.mxu0 0.0
  %1236 = vmatpush.msra.mxu0 0.0
  %1237 = vmatpush.msra.mxu0 0.0
  %1238 = vmatpush.msra.mxu0 0.0
  %1239 = vmatpush.msra.mxu0 0.0
  %1240 = vmatpush.msra.mxu0 0.0
  %1241 = vmatpush.msra.mxu0 0.0
  %1242 = vmatpush.msra.mxu0 0.0
  %1243 = vmatpush.msra.mxu0 %v768
  %1244 = vmatpush.msra.mxu0 %v767
  %1245 = vmatpush.msra.mxu0 %v766
  %1246 = vmatpush.msra.mxu0 %v765
  %1247 = vmatmul.f32.gmra.mxu0 %v1229
  %v1248 = vpop.f32.mrf.mxu0
  %v1249 = vadd.f32 0.0, %v1248
  %1250 = vdwg.mxu0
  %v1251 = vadd.f32 %v763, %v1249
  %v1252 = vtanh.pop %v1251
  %v1253 = vxor.u32 %v1251, 2147483648
  %v1254 = vmul.f32 %v1253, 1.442695
  %v1255 = vpow.pop %v1254
  %v1256 = vadd.f32 %v1255, 1.0
  %v1257 = vrcp.pop %v1256
  %v1258 = vmul.f32 %v1256, %v1257
  %v1259 = vsub.f32 1.0, %v1258
  %v1260 = vmul.f32 %v1257, %v1259
  %v1261 = vadd.f32 %v1257, %v1260
  %vm1262 = vweird.f32 %v1256
  %vm1263 = vweird.f32 %v1257
  %vm1264 = vmor %vm1262, %vm1263
  %v1265 = vsel %vm1264, %v1257, %v1261
  %v1266 = vand.u32 2147483647, %v1256
  %vm1267 = vcmp.eq.f32.partialorder %v1266, 8.507059e+37
  %v1268 = vand.u32 %v1256, 2147483648
  %v1269 = vor.u32 1.1754944e-38, %v1268
  %v1270 = vsel %vm1267, %v1269, %v1265
  %v1271 = vmul.f32 1.0, %v1270
  %v1272 = vsel %vm153, %v1252, %v1271
  %v1273 = vmul.f32 %v1272, %v1217
  %1275 = vrot.lane.b32.xlu0 %v1272, 64
  %v1276 = vpop.permute.xlu0 %1275
  %v1278 = vmul.f32 %v1272, %v1276
  %1280 = vrot.lane.b32.xlu0 %v1278, 32
  %v1281 = vpop.permute.xlu0 %1280
  %v1283 = vadd.f32 %v1273, %v1281
  %v1284 = vtanh.pop %v1283
  %1286 = vrot.lane.b32.xlu0 %v1284, 64
  %v1287 = vpop.permute.xlu0 %1286
  %v1289 = vmul.f32 %v1272, %v1287
  %1291 = vrot.lane.b32.xlu0 %v1289, 32
  %v1292 = vpop.permute.xlu0 %1291
  %1294 = vst.msk [vmem:[#allocation2 + $0x38] sm:$0xff] %vm154, %v1292
  %v1295 = vld [vmem:[#allocation2] sm:$0xff]
  %v1296 = vld [vmem:[#allocation2 + $0x8] sm:$0xff]
  %v1297 = vld [vmem:[#allocation2 + $0x10] sm:$0xff]
  %v1298 = vld [vmem:[#allocation2 + $0x18] sm:$0xff]
  %v1299 = vld [vmem:[#allocation2 + $0x20] sm:$0xff]
  %v1300 = vld [vmem:[#allocation2 + $0x28] sm:$0xff]
  %v1301 = vld [vmem:[#allocation2 + $0x30] sm:$0xff]
  %v1302 = vld [vmem:[#allocation2 + $0x38] sm:$0xff]
  %v1303 = vld [vmem:[%s7] sm:$0x1]
  %v1304 = vld [vmem:[%s8] sm:$0x1]
  %v1305 = vsel %vm154, %v1295, 0.0
  %1306 = vadd.xlane.f32.xlu0 %v1305
  %v1307 = vpop.xlane.xlu0 %1306
  %v1308 = vsel %vm154, %v1296, 0.0
  %1309 = vadd.xlane.f32.xlu0 %v1308
  %v1310 = vpop.xlane.xlu0 %1309
  %v1311 = vsel %vm154, %v1297, 0.0
  %1312 = vadd.xlane.f32.xlu0 %v1311
  %v1313 = vpop.xlane.xlu0 %1312
  %v1314 = vsel %vm154, %v1298, 0.0
  %1315 = vadd.xlane.f32.xlu0 %v1314
  %v1316 = vpop.xlane.xlu0 %1315
  %v1317 = vsel %vm154, %v1299, 0.0
  %1318 = vadd.xlane.f32.xlu0 %v1317
  %v1319 = vpop.xlane.xlu0 %1318
  %v1320 = vsel %vm154, %v1300, 0.0
  %1321 = vadd.xlane.f32.xlu0 %v1320
  %v1322 = vpop.xlane.xlu0 %1321
  %v1323 = vsel %vm154, %v1301, 0.0
  %1324 = vadd.xlane.f32.xlu0 %v1323
  %v1325 = vpop.xlane.xlu0 %1324
  %v1326 = vsel %vm154, %v1302, 0.0
  %1327 = vadd.xlane.f32.xlu0 %v1326
  %v1328 = vpop.xlane.xlu0 %1327
  %v1329 = vrcp.pop 32.0
  %v1330 = vmul.f32 32.0, %v1329
  %v1331 = vsub.f32 1.0, %v1330
  %v1332 = vmul.f32 %v1329, %v1331
  %v1333 = vadd.f32 %v1329, %v1332
  %vm1334 = vweird.f32 %v1329
  %v1335 = vsel %vm1334, %v1329, %v1333
  %v1336 = vmul.f32 %v1307, %v1335
  %v1337 = vmul.f32 %v1310, %v1335
  %v1338 = vmul.f32 %v1313, %v1335
  %v1339 = vmul.f32 %v1316, %v1335
  %v1340 = vmul.f32 %v1319, %v1335
  %v1341 = vmul.f32 %v1322, %v1335
  %v1342 = vmul.f32 %v1325, %v1335
  %v1343 = vmul.f32 %v1328, %v1335
  %v1344 = vsub.f32 %v1295, %v1336
  %v1345 = vsub.f32 %v1296, %v1337
  %v1346 = vsub.f32 %v1297, %v1338
  %v1347 = vsub.f32 %v1298, %v1339
  %v1348 = vsub.f32 %v1299, %v1340
  %v1349 = vsub.f32 %v1300, %v1341
  %v1350 = vsub.f32 %v1301, %v1342
  %v1351 = vsub.f32 %v1302, %v1343
  %v1352 = vmul.f32 %v1344, %v1344
  %v1353 = vmul.f32 %v1345, %v1345
  %v1354 = vmul.f32 %v1346, %v1346
  %v1355 = vmul.f32 %v1347, %v1347
  %v1356 = vmul.f32 %v1348, %v1348
  %v1357 = vmul.f32 %v1349, %v1349
  %v1358 = vmul.f32 %v1350, %v1350
  %v1359 = vmul.f32 %v1351, %v1351
  %v1360 = vsel %vm154, %v1352, 0.0
  %1361 = vadd.xlane.f32.xlu0 %v1360
  %v1362 = vpop.xlane.xlu0 %1361
  %v1363 = vsel %vm154, %v1353, 0.0
  %1364 = vadd.xlane.f32.xlu0 %v1363
  %v1365 = vpop.xlane.xlu0 %1364
  %v1366 = vsel %vm154, %v1354, 0.0
  %1367 = vadd.xlane.f32.xlu0 %v1366
  %v1368 = vpop.xlane.xlu0 %1367
  %v1369 = vsel %vm154, %v1355, 0.0
  %1370 = vadd.xlane.f32.xlu0 %v1369
  %v1371 = vpop.xlane.xlu0 %1370
  %v1372 = vsel %vm154, %v1356, 0.0
  %1373 = vadd.xlane.f32.xlu0 %v1372
  %v1374 = vpop.xlane.xlu0 %1373
  %v1375 = vsel %vm154, %v1357, 0.0
  %1376 = vadd.xlane.f32.xlu0 %v1375
  %v1377 = vpop.xlane.xlu0 %1376
  %v1378 = vsel %vm154, %v1358, 0.0
  %1379 = vadd.xlane.f32.xlu0 %v1378
  %v1380 = vpop.xlane.xlu0 %1379
  %v1381 = vsel %vm154, %v1359, 0.0
  %1382 = vadd.xlane.f32.xlu0 %v1381
  %v1383 = vpop.xlane.xlu0 %1382
  %v1384 = vmul.f32 %v1362, %v1335
  %v1385 = vmul.f32 %v1365, %v1335
  %v1386 = vmul.f32 %v1368, %v1335
  %v1387 = vmul.f32 %v1371, %v1335
  %v1388 = vmul.f32 %v1374, %v1335
  %v1389 = vmul.f32 %v1377, %v1335
  %v1390 = vmul.f32 %v1380, %v1335
  %v1391 = vmul.f32 %v1383, %v1335
  %v1392 = vadd.f32 %v1384, 1e-05
  %v1393 = vadd.f32 %v1385, 1e-05
  %v1394 = vadd.f32 %v1386, 1e-05
  %v1395 = vadd.f32 %v1387, 1e-05
  %v1396 = vadd.f32 %v1388, 1e-05
  %v1397 = vadd.f32 %v1389, 1e-05
  %v1398 = vadd.f32 %v1390, 1e-05
  %v1399 = vadd.f32 %v1391, 1e-05
  %v1400 = vrsqrt.pop %v1392
  %v1401 = vmul.f32 %v1400, %v1392
  %v1402 = vmul.f32 %v1401, %v1400
  %v1403 = vmul.f32 0.5, %v1402
  %v1404 = vsub.f32 1.5, %v1403
  %v1405 = vmul.f32 %v1400, %v1404
  %vm1406 = vweird.f32 %v1392
  %vm1407 = vweird.f32 %v1400
  %vm1408 = vmor %vm1406, %vm1407
  %v1409 = vsel %vm1408, %v1400, %v1405
  %v1410 = vrsqrt.pop %v1393
  %v1411 = vmul.f32 %v1410, %v1393
  %v1412 = vmul.f32 %v1411, %v1410
  %v1413 = vmul.f32 0.5, %v1412
  %v1414 = vsub.f32 1.5, %v1413
  %v1415 = vmul.f32 %v1410, %v1414
  %vm1416 = vweird.f32 %v1393
  %vm1417 = vweird.f32 %v1410
  %vm1418 = vmor %vm1416, %vm1417
  %v1419 = vsel %vm1418, %v1410, %v1415
  %v1420 = vrsqrt.pop %v1394
  %v1421 = vmul.f32 %v1420, %v1394
  %v1422 = vmul.f32 %v1421, %v1420
  %v1423 = vmul.f32 0.5, %v1422
  %v1424 = vsub.f32 1.5, %v1423
  %v1425 = vmul.f32 %v1420, %v1424
  %vm1426 = vweird.f32 %v1394
  %vm1427 = vweird.f32 %v1420
  %vm1428 = vmor %vm1426, %vm1427
  %v1429 = vsel %vm1428, %v1420, %v1425
  %v1430 = vrsqrt.pop %v1395
  %v1431 = vmul.f32 %v1430, %v1395
  %v1432 = vmul.f32 %v1431, %v1430
  %v1433 = vmul.f32 0.5, %v1432
  %v1434 = vsub.f32 1.5, %v1433
  %v1435 = vmul.f32 %v1430, %v1434
  %vm1436 = vweird.f32 %v1395
  %vm1437 = vweird.f32 %v1430
  %vm1438 = vmor %vm1436, %vm1437
  %v1439 = vsel %vm1438, %v1430, %v1435
  %v1440 = vrsqrt.pop %v1396
  %v1441 = vmul.f32 %v1440, %v1396
  %v1442 = vmul.f32 %v1441, %v1440
  %v1443 = vmul.f32 0.5, %v1442
  %v1444 = vsub.f32 1.5, %v1443
  %v1445 = vmul.f32 %v1440, %v1444
  %vm1446 = vweird.f32 %v1396
  %vm1447 = vweird.f32 %v1440
  %vm1448 = vmor %vm1446, %vm1447
  %v1449 = vsel %vm1448, %v1440, %v1445
  %v1450 = vrsqrt.pop %v1397
  %v1451 = vmul.f32 %v1450, %v1397
  %v1452 = vmul.f32 %v1451, %v1450
  %v1453 = vmul.f32 0.5, %v1452
  %v1454 = vsub.f32 1.5, %v1453
  %v1455 = vmul.f32 %v1450, %v1454
  %vm1456 = vweird.f32 %v1397
  %vm1457 = vweird.f32 %v1450
  %vm1458 = vmor %vm1456, %vm1457
  %v1459 = vsel %vm1458, %v1450, %v1455
  %v1460 = vrsqrt.pop %v1398
  %v1461 = vmul.f32 %v1460, %v1398
  %v1462 = vmul.f32 %v1461, %v1460
  %v1463 = vmul.f32 0.5, %v1462
  %v1464 = vsub.f32 1.5, %v1463
  %v1465 = vmul.f32 %v1460, %v1464
  %vm1466 = vweird.f32 %v1398
  %vm1467 = vweird.f32 %v1460
  %vm1468 = vmor %vm1466, %vm1467
  %v1469 = vsel %vm1468, %v1460, %v1465
  %v1470 = vrsqrt.pop %v1399
  %v1471 = vmul.f32 %v1470, %v1399
  %v1472 = vmul.f32 %v1471, %v1470
  %v1473 = vmul.f32 0.5, %v1472
  %v1474 = vsub.f32 1.5, %v1473
  %v1475 = vmul.f32 %v1470, %v1474
  %vm1476 = vweird.f32 %v1399
  %vm1477 = vweird.f32 %v1470
  %vm1478 = vmor %vm1476, %vm1477
  %v1479 = vsel %vm1478, %v1470, %v1475
  %v1480 = vmul.f32 %v1344, %v1409
  %v1481 = vmul.f32 %v1345, %v1419
  %v1482 = vmul.f32 %v1346, %v1429
  %v1483 = vmul.f32 %v1347, %v1439
  %v1484 = vmul.f32 %v1348, %v1449
  %v1485 = vmul.f32 %v1349, %v1459
  %v1486 = vmul.f32 %v1350, %v1469
  %v1487 = vmul.f32 %v1351, %v1479
  %v1489 = vperm.slane %v1303, 0
  %v1491 = vmul.f32 %v1480, %v1489
  %v1492 = vmul.f32 %v1481, %v1489
  %v1493 = vmul.f32 %v1482, %v1489
  %v1494 = vmul.f32 %v1483, %v1489
  %v1495 = vmul.f32 %v1484, %v1489
  %v1496 = vmul.f32 %v1485, %v1489
  %v1497 = vmul.f32 %v1486, %v1489
  %v1498 = vmul.f32 %v1487, %v1489
  %v1500 = vperm.slane %v1304, 0
  %v1502 = vadd.f32 %v1491, %v1500
  %v1503 = vadd.f32 %v1492, %v1500
  %v1504 = vadd.f32 %v1493, %v1500
  %v1505 = vadd.f32 %v1494, %v1500
  %v1506 = vadd.f32 %v1495, %v1500
  %v1507 = vadd.f32 %v1496, %v1500
  %v1508 = vadd.f32 %v1497, %v1500
  %v1509 = vadd.f32 %v1498, %v1500
  %v1510 = vld [vmem:[%s9] sm:$0xff]
  %v1511 = vld [vmem:[%s9 + $0x8] sm:$0xff]
  %v1512 = vld [vmem:[%s9 + $0x10] sm:$0xff]
  %v1513 = vld [vmem:[%s9 + $0x18] sm:$0xff]
  %v1514 = vld [vmem:[%s10] sm:$0x1]
  %v1516 = vperm.slane %v1514, 0
  %v1519 = vsel %vm154, %v1502, 0
  %v1522 = vsel %vm154, %v1503, 0
  %v1525 = vsel %vm154, %v1504, 0
  %v1528 = vsel %vm154, %v1505, 0
  %v1531 = vsel %vm154, %v1506, 0
  %v1534 = vsel %vm154, %v1507, 0
  %v1537 = vsel %vm154, %v1508, 0
  %v1540 = vsel %vm154, %v1509, 0
  %1542 = vmatpush.msra.mxu0 0.0
  %1543 = vmatpush.msra.mxu0 0.0
  %1544 = vmatpush.msra.mxu0 0.0
  %1545 = vmatpush.msra.mxu0 0.0
  %1546 = vmatpush.msra.mxu0 0.0
  %1547 = vmatpush.msra.mxu0 0.0
  %1548 = vmatpush.msra.mxu0 0.0
  %1549 = vmatpush.msra.mxu0 0.0
  %1550 = vmatpush.msra.mxu0 0.0
  %1551 = vmatpush.msra.mxu0 0.0
  %1552 = vmatpush.msra.mxu0 0.0
  %1553 = vmatpush.msra.mxu0 0.0
  %1554 = vmatpush.msra.mxu0 %v1513
  %1555 = vmatpush.msra.mxu0 %v1512
  %1556 = vmatpush.msra.mxu0 %v1511
  %1557 = vmatpush.msra.mxu0 %v1510
  %1558 = vmatmul.f32.gmra.mxu0 %v1519
  %v1559 = vpop.f32.mrf.mxu0
  %v1560 = vadd.f32 %v1516, %v1559
  %1561 = vmatmul.f32.gmra.mxu0 %v1522
  %v1562 = vpop.f32.mrf.mxu0
  %v1563 = vadd.f32 %v1516, %v1562
  %1564 = vmatmul.f32.gmra.mxu0 %v1525
  %v1565 = vpop.f32.mrf.mxu0
  %v1566 = vadd.f32 %v1516, %v1565
  %1567 = vmatmul.f32.gmra.mxu0 %v1528
  %v1568 = vpop.f32.mrf.mxu0
  %v1569 = vadd.f32 %v1516, %v1568
  %1570 = vmatmul.f32.gmra.mxu0 %v1531
  %v1571 = vpop.f32.mrf.mxu0
  %v1572 = vadd.f32 %v1516, %v1571
  %1573 = vmatmul.f32.gmra.mxu0 %v1534
  %v1574 = vpop.f32.mrf.mxu0
  %v1575 = vadd.f32 %v1516, %v1574
  %1576 = vmatmul.f32.gmra.mxu0 %v1537
  %v1577 = vpop.f32.mrf.mxu0
  %v1578 = vadd.f32 %v1516, %v1577
  %1579 = vmatmul.f32.gmra.mxu0 %v1540
  %v1580 = vpop.f32.mrf.mxu0
  %v1581 = vadd.f32 %v1516, %v1580
  %1582 = vdwg.mxu0
  %v1583 = vtanh.pop %v1560
  %v1584 = vtanh.pop %v1563
  %v1585 = vtanh.pop %v1566
  %v1586 = vtanh.pop %v1569
  %v1587 = vtanh.pop %v1572
  %v1588 = vtanh.pop %v1575
  %v1589 = vtanh.pop %v1578
  %v1590 = vtanh.pop %v1581
  %v1591 = vld [vmem:[%s11] sm:$0x1]
  %v1593 = vperm.slane %v1591, 0
  %v1595 = vmul.f32 %v1583, %v1593
  %v1596 = vmul.f32 %v1584, %v1593
  %v1597 = vmul.f32 %v1585, %v1593
  %v1598 = vmul.f32 %v1586, %v1593
  %v1599 = vmul.f32 %v1587, %v1593
  %v1600 = vmul.f32 %v1588, %v1593
  %v1601 = vmul.f32 %v1589, %v1593
  %v1602 = vmul.f32 %v1590, %v1593
  %v1603 = vsel %vm154, %v1595, 0.0
  %1604 = vadd.xlane.f32.xlu0 %v1603
  %v1605 = vpop.xlane.xlu0 %1604
  %v1606 = vsel %vm154, %v1596, 0.0
  %1607 = vadd.xlane.f32.xlu0 %v1606
  %v1608 = vpop.xlane.xlu0 %1607
  %v1609 = vsel %vm154, %v1597, 0.0
  %1610 = vadd.xlane.f32.xlu0 %v1609
  %v1611 = vpop.xlane.xlu0 %1610
  %v1612 = vsel %vm154, %v1598, 0.0
  %1613 = vadd.xlane.f32.xlu0 %v1612
  %v1614 = vpop.xlane.xlu0 %1613
  %v1615 = vsel %vm154, %v1599, 0.0
  %1616 = vadd.xlane.f32.xlu0 %v1615
  %v1617 = vpop.xlane.xlu0 %1616
  %v1618 = vsel %vm154, %v1600, 0.0
  %1619 = vadd.xlane.f32.xlu0 %v1618
  %v1620 = vpop.xlane.xlu0 %1619
  %v1621 = vsel %vm154, %v1601, 0.0
  %1622 = vadd.xlane.f32.xlu0 %v1621
  %v1623 = vpop.xlane.xlu0 %1622
  %v1624 = vsel %vm154, %v1602, 0.0
  %1625 = vadd.xlane.f32.xlu0 %v1624
  %v1626 = vpop.xlane.xlu0 %1625
  %v1627 = vld [vmem:[#allocation3] sm:$0x1]
  %v1629 = vperm.slane %v1627, 0
  %v1631 = vadd.f32 %v1605, %v1629
  %v1632 = vadd.f32 %v1608, %v1629
  %v1633 = vadd.f32 %v1611, %v1629
  %v1634 = vadd.f32 %v1614, %v1629
  %v1635 = vadd.f32 %v1617, %v1629
  %v1636 = vadd.f32 %v1620, %v1629
  %v1637 = vadd.f32 %v1623, %v1629
  %v1638 = vadd.f32 %v1626, %v1629
  %v1639 = vmax.f32 %v1631, %v1632
  %v1640 = vmax.f32 %v1639, %v1633
  %v1641 = vmax.f32 %v1640, %v1634
  %v1642 = vmax.f32 %v1641, %v1635
  %v1643 = vmax.f32 %v1642, %v1636
  %v1644 = vmax.f32 %v1643, %v1637
  %v1645 = vmax.f32 %v1644, %v1638
  %v1646 = vsub.f32 %v1631, %v1645
  %v1647 = vmul.f32 %v1646, 1.442695
  %v1648 = vpow.pop %v1647
  %v1649 = vsub.f32 %v1632, %v1645
  %v1650 = vmul.f32 %v1649, 1.442695
  %v1651 = vpow.pop %v1650
  %v1652 = vsub.f32 %v1633, %v1645
  %v1653 = vmul.f32 %v1652, 1.442695
  %v1654 = vpow.pop %v1653
  %v1655 = vsub.f32 %v1634, %v1645
  %v1656 = vmul.f32 %v1655, 1.442695
  %v1657 = vpow.pop %v1656
  %v1658 = vsub.f32 %v1635, %v1645
  %v1659 = vmul.f32 %v1658, 1.442695
  %v1660 = vpow.pop %v1659
  %v1661 = vsub.f32 %v1636, %v1645
  %v1662 = vmul.f32 %v1661, 1.442695
  %v1663 = vpow.pop %v1662
  %v1664 = vsub.f32 %v1637, %v1645
  %v1665 = vmul.f32 %v1664, 1.442695
  %v1666 = vpow.pop %v1665
  %v1667 = vsub.f32 %v1638, %v1645
  %v1668 = vmul.f32 %v1667, 1.442695
  %v1669 = vpow.pop %v1668
  %v1670 = vadd.f32 %v1648, %v1651
  %v1671 = vadd.f32 %v1670, %v1654
  %v1672 = vadd.f32 %v1671, %v1657
  %v1673 = vadd.f32 %v1672, %v1660
  %v1674 = vadd.f32 %v1673, %v1663
  %v1675 = vadd.f32 %v1674, %v1666
  %v1676 = vadd.f32 %v1675, %v1669
  %v1677 = vrcp.pop %v1676
  %v1678 = vmul.f32 %v1676, %v1677
  %v1679 = vsub.f32 1.0, %v1678
  %v1680 = vmul.f32 %v1677, %v1679
  %v1681 = vadd.f32 %v1677, %v1680
  %vm1682 = vweird.f32 %v1676
  %vm1683 = vweird.f32 %v1677
  %vm1684 = vmor %vm1682, %vm1683
  %v1685 = vsel %vm1684, %v1677, %v1681
  %v1686 = vand.u32 2147483647, %v1676
  %vm1687 = vcmp.eq.f32.partialorder %v1686, 8.507059e+37
  %v1688 = vand.u32 %v1676, 2147483648
  %v1689 = vor.u32 1.1754944e-38, %v1688
  %v1690 = vsel %vm1687, %v1689, %v1685
  %v1691 = vmul.f32 1.0, %v1690
  %v1692 = vmul.f32 %v1648, %v1691
  %1694 = vset.pattern.permute.xlu0 0
  %1695 = vperm.xlu0 %1694, %v1692
  %v1696 = vpop.permute.xlu0 %1695
  %v1698 = vmul.f32 %v1696, %v1502
  %v1699 = vadd.f32 %v1698, 0.0
  %v1700 = vmul.f32 %v1651, %v1691
  %1702 = vset.pattern.permute.xlu0 0
  %1703 = vperm.xlu0 %1702, %v1700
  %v1704 = vpop.permute.xlu0 %1703
  %v1706 = vmul.f32 %v1704, %v1503
  %v1707 = vadd.f32 %v1699, %v1706
  %v1708 = vmul.f32 %v1654, %v1691
  %1710 = vset.pattern.permute.xlu0 0
  %1711 = vperm.xlu0 %1710, %v1708
  %v1712 = vpop.permute.xlu0 %1711
  %v1714 = vmul.f32 %v1712, %v1504
  %v1715 = vadd.f32 %v1707, %v1714
  %v1716 = vmul.f32 %v1657, %v1691
  %1718 = vset.pattern.permute.xlu0 0
  %1719 = vperm.xlu0 %1718, %v1716
  %v1720 = vpop.permute.xlu0 %1719
  %v1722 = vmul.f32 %v1720, %v1505
  %v1723 = vadd.f32 %v1715, %v1722
  %v1724 = vmul.f32 %v1660, %v1691
  %1726 = vset.pattern.permute.xlu0 0
  %1727 = vperm.xlu0 %1726, %v1724
  %v1728 = vpop.permute.xlu0 %1727
  %v1730 = vmul.f32 %v1728, %v1506
  %v1731 = vadd.f32 %v1723, %v1730
  %v1732 = vmul.f32 %v1663, %v1691
  %1734 = vset.pattern.permute.xlu0 0
  %1735 = vperm.xlu0 %1734, %v1732
  %v1736 = vpop.permute.xlu0 %1735
  %v1738 = vmul.f32 %v1736, %v1507
  %v1739 = vadd.f32 %v1731, %v1738
  %v1740 = vmul.f32 %v1666, %v1691
  %1742 = vset.pattern.permute.xlu0 0
  %1743 = vperm.xlu0 %1742, %v1740
  %v1744 = vpop.permute.xlu0 %1743
  %v1746 = vmul.f32 %v1744, %v1508
  %v1747 = vadd.f32 %v1739, %v1746
  %v1748 = vmul.f32 %v1669, %v1691
  %1750 = vset.pattern.permute.xlu0 0
  %1751 = vperm.xlu0 %1750, %v1748
  %v1752 = vpop.permute.xlu0 %1751
  %v1754 = vmul.f32 %v1752, %v1509
  %v1755 = vadd.f32 %v1747, %v1754
  %v1756 = vld [vmem:[%s13] sm:$0xff]
  %v1757 = vld [vmem:[%s13 + $0x8] sm:$0xff]
  %v1758 = vld [vmem:[%s13 + $0x10] sm:$0xff]
  %v1759 = vld [vmem:[%s13 + $0x18] sm:$0xff]
  %v1760 = vld [vmem:[%s14] sm:$0x1]
  %v1762 = vperm.slane %v1760, 0
  %v1765 = vsel %vm154, %v1755, 0
  %1767 = vmatpush.msra.mxu0 0.0
  %1768 = vmatpush.msra.mxu0 0.0
  %1769 = vmatpush.msra.mxu0 0.0
  %1770 = vmatpush.msra.mxu0 0.0
  %1771 = vmatpush.msra.mxu0 0.0
  %1772 = vmatpush.msra.mxu0 0.0
  %1773 = vmatpush.msra.mxu0 0.0
  %1774 = vmatpush.msra.mxu0 0.0
  %1775 = vmatpush.msra.mxu0 0.0
  %1776 = vmatpush.msra.mxu0 0.0
  %1777 = vmatpush.msra.mxu0 0.0
  %1778 = vmatpush.msra.mxu0 0.0
  %1779 = vmatpush.msra.mxu0 %v1759
  %1780 = vmatpush.msra.mxu0 %v1758
  %1781 = vmatpush.msra.mxu0 %v1757
  %1782 = vmatpush.msra.mxu0 %v1756
  %1783 = vmatmul.f32.gmra.mxu0 %v1765
  %v1784 = vpop.f32.mrf.mxu0
  %v1785 = vadd.f32 %v1762, %v1784
  %1786 = vdwg.mxu0
  %v1787 = vld [vmem:[%s15] sm:$0x1]
  %v1788 = vld [vmem:[%s16] sm:$0x1]
  %v1789 = vsel %vm154, %v1785, 0.0
  %1790 = vadd.xlane.f32.xlu0 %v1789
  %v1791 = vpop.xlane.xlu0 %1790
  %v1792 = vmul.f32 %v1791, %v1335
  %v1793 = vsub.f32 %v1785, %v1792
  %v1794 = vmul.f32 %v1793, %v1793
  %v1795 = vsel %vm154, %v1794, 0.0
  %1796 = vadd.xlane.f32.xlu0 %v1795
  %v1797 = vpop.xlane.xlu0 %1796
  %v1798 = vmul.f32 %v1797, %v1335
  %v1799 = vadd.f32 %v1798, 1e-05
  %v1800 = vrsqrt.pop %v1799
  %v1801 = vmul.f32 %v1800, %v1799
  %v1802 = vmul.f32 %v1801, %v1800
  %v1803 = vmul.f32 0.5, %v1802
  %v1804 = vsub.f32 1.5, %v1803
  %v1805 = vmul.f32 %v1800, %v1804
  %vm1806 = vweird.f32 %v1799
  %vm1807 = vweird.f32 %v1800
  %vm1808 = vmor %vm1806, %vm1807
  %v1809 = vsel %vm1808, %v1800, %v1805
  %v1810 = vmul.f32 %v1793, %v1809
  %v1812 = vperm.slane %v1787, 0
  %v1814 = vmul.f32 %v1810, %v1812
  %v1816 = vperm.slane %v1788, 0
  %v1818 = vadd.f32 %v1814, %v1816
  %v1819 = vmax.f32 %v1818, 0.0
  %v1820 = vld [vmem:[%s17] sm:$0xff]
  %v1821 = vld [vmem:[%s17 + $0x8] sm:$0xff]
  %v1822 = vld [vmem:[%s17 + $0x10] sm:$0xff]
  %v1823 = vld [vmem:[%s17 + $0x18] sm:$0xff]
  %v1824 = vld [vmem:[#allocation4] sm:$0x1]
  %v1826 = vperm.slane %v1824, 0
  %v1829 = vsel %vm154, %v1819, 0
  %1831 = vmatpush.msra.mxu0 0.0
  %1832 = vmatpush.msra.mxu0 0.0
  %1833 = vmatpush.msra.mxu0 0.0
  %1834 = vmatpush.msra.mxu0 0.0
  %1835 = vmatpush.msra.mxu0 0.0
  %1836 = vmatpush.msra.mxu0 0.0
  %1837 = vmatpush.msra.mxu0 0.0
  %1838 = vmatpush.msra.mxu0 0.0
  %1839 = vmatpush.msra.mxu0 0.0
  %1840 = vmatpush.msra.mxu0 0.0
  %1841 = vmatpush.msra.mxu0 0.0
  %1842 = vmatpush.msra.mxu0 0.0
  %1843 = vmatpush.msra.mxu0 %v1823
  %1844 = vmatpush.msra.mxu0 %v1822
  %1845 = vmatpush.msra.mxu0 %v1821
  %1846 = vmatpush.msra.mxu0 %v1820
  %1847 = vmatmul.f32.gmra.mxu0 %v1829
  %v1848 = vpop.f32.mrf.mxu0
  %v1849 = vadd.f32 %v1826, %v1848
  %1850 = vdwg.mxu0
  %v1851 = vxor.u32 %v1849, 2147483648
  %v1852 = vmul.f32 %v1851, 1.442695
  %v1853 = vpow.pop %v1852
  %v1854 = vadd.f32 %v1853, 1.0
  %v1855 = vrcp.pop %v1854
  %v1856 = vmul.f32 %v1854, %v1855
  %v1857 = vsub.f32 1.0, %v1856
  %v1858 = vmul.f32 %v1855, %v1857
  %v1859 = vadd.f32 %v1855, %v1858
  %vm1860 = vweird.f32 %v1854
  %vm1861 = vweird.f32 %v1855
  %vm1862 = vmor %vm1860, %vm1861
  %v1863 = vsel %vm1862, %v1855, %v1859
  %v1864 = vand.u32 2147483647, %v1854
  %vm1865 = vcmp.eq.f32.partialorder %v1864, 8.507059e+37
  %v1866 = vand.u32 %v1854, 2147483648
  %v1867 = vor.u32 1.1754944e-38, %v1866
  %v1868 = vsel %vm1865, %v1867, %v1863
  %v1869 = vmul.f32 1.0, %v1868
  %vm1870 = vcmask 7168
  %1871 = vst.msk [vmem:[%s19] sm:$0xff] %vm1870, %v1869
  // Predicated region
  $region78: #{lstm_model_forward.1} parent=0 // pred_check
    _
  $region79: #{lstm_model_forward.1} parent=0 // pred_check_branch
    %1873 = sbr.rel (0) target = $region81
  $region80: #{lstm_model_forward.1} parent=0 // pred_region
    _
  $region81: #{lstm_model_forward.1} parent=0 // pred_fallthru
    _
  // Predicated region
  $region82: #{lstm_model_forward.1} parent=0 // pred_check
    _
  $region83: #{lstm_model_forward.1} parent=0 // pred_check_branch
    %1875 = sbr.rel (0) target = $region85
  $region84: #{lstm_model_forward.1} parent=0 // pred_region
    _
  $region85: #{lstm_model_forward.1} parent=0 // pred_fallthru
    _

</llo_original>
